<compile_context>
chip_gen: v7x
topology: tpu7x:2x2x1
jax: 0.10.0
libtpu: 0.0.40
codegen_flags: <defaults>
</compile_context>

<pallas_src>
import jax
import jax.numpy as jnp
import numpy as np
from jax import lax
from jax.experimental import pallas as pl
from jax.experimental.pallas import tpu as pltpu

# ---- model dims (small, consistent with the module) ----
VOCAB = 50
EMB = 32
HIDDEN = 64
LATENT = 32
BATCH = 8
SEQ = 10

HP = ((HIDDEN + 127) // 128) * 128            # per-gate lane-padded hidden width
OUT_PAD = ((2 * LATENT + 127) // 128) * 128   # lane-dense combined mu|logvar width


def encoder_kernel(ids_ref, emb_ref, wih_ref, whh_ref, b_ref,
                   wmulv_ref, bmulv_ref, out_ref, xp_sc):
    TB = SEQ * BATCH

    # --- fused embedding gather: one_hot(ids) @ emb_table on the MXU ---
    ids = ids_ref[...]                                              # (TB, 1) int32
    vocab_iota = lax.broadcasted_iota(jnp.int32, (TB, VOCAB), 1)
    onehot = jnp.where(ids == vocab_iota, 1.0, 0.0).astype(jnp.bfloat16)
    x = jnp.dot(onehot, emb_ref[...],
                preferred_element_type=jnp.float32)                 # (TB, E) f32

    # --- hoisted input projection + folded bias for all T steps at once ---
    xproj = jnp.dot(x.astype(jnp.bfloat16), wih_ref[...],
                    preferred_element_type=jnp.float32) + b_ref[...]  # (TB, 4*HP)
    xp_sc[...] = xproj

    whh = whh_ref[...]                                              # (HP, 4*HP) bf16

    def step(t, carry):
        h, c = carry                                                # (B, HP) f32
        off = pl.multiple_of(t * BATCH, BATCH)
        gates = xp_sc[pl.ds(off, BATCH), :] + jnp.dot(
            h.astype(jnp.bfloat16), whh, preferred_element_type=jnp.float32)
        # PyTorch gate order (i, f, g, o); each slice is a whole 128-lane tile.
        i = jax.nn.sigmoid(gates[:, 0 * HP:1 * HP])
        f = jax.nn.sigmoid(gates[:, 1 * HP:2 * HP])
        g = jnp.tanh(gates[:, 2 * HP:3 * HP])
        o = jax.nn.sigmoid(gates[:, 3 * HP:4 * HP])
        c_new = f * c + i * g
        h_new = o * jnp.tanh(c_new)
        return h_new, c_new

    h0 = jnp.zeros((BATCH, HP), jnp.float32)
    c0 = jnp.zeros((BATCH, HP), jnp.float32)
    h, _ = lax.fori_loop(0, SEQ, step, (h0, c0), unroll=True)

    # --- merged mu|logvar head: one matmul, lane-dense (B, 128) output ---
    out_ref[...] = (jnp.dot(h.astype(jnp.bfloat16), wmulv_ref[...],
                            preferred_element_type=jnp.float32) + bmulv_ref[...])


def _prep_weights(params):
    """Pre-transpose, lane-pad per gate, merge heads, and cast MXU operands to bf16."""
    emb_table, w_ih, w_hh, b_ih, b_hh, w_mu, b_mu, w_lv, b_lv = params

    def pad_gate_cols(w_t):  # (in, 4*HIDDEN) -> (in, 4*HP), gate k at cols [k*HP, k*HP+H)
        blocks = [jnp.pad(w_t[:, k * HIDDEN:(k + 1) * HIDDEN],
                          ((0, 0), (0, HP - HIDDEN))) for k in range(4)]
        return jnp.concatenate(blocks, axis=1)

    wih_p = pad_gate_cols(w_ih.T).astype(jnp.bfloat16)                      # (E, 4*HP)
    whh_p = jnp.pad(pad_gate_cols(w_hh.T),
                    ((0, HP - HIDDEN), (0, 0))).astype(jnp.bfloat16)        # (HP, 4*HP)
    b = b_ih + b_hh
    b_p = jnp.concatenate(
        [jnp.pad(b[k * HIDDEN:(k + 1) * HIDDEN], (0, HP - HIDDEN))
         for k in range(4)]).reshape(1, 4 * HP).astype(jnp.float32)

    wmulv = jnp.concatenate([w_mu.T, w_lv.T], axis=1)                       # (H, 2L)
    wmulv = jnp.pad(wmulv, ((0, HP - HIDDEN),
                            (0, OUT_PAD - 2 * LATENT))).astype(jnp.bfloat16)  # (HP, 128)
    bmulv = jnp.pad(jnp.concatenate([b_mu, b_lv]),
                    (0, OUT_PAD - 2 * LATENT)).reshape(1, OUT_PAD).astype(jnp.float32)

    emb_bf = emb_table.astype(jnp.bfloat16)
    return emb_bf, wih_p, whh_p, b_p, wmulv, bmulv


def encoder_forward(token_ids, params):
    B, T = token_ids.shape
    assert (B, T) == (BATCH, SEQ)
    emb_bf, wih_p, whh_p, b_p, wmulv, bmulv = _prep_weights(params)

    # time-major flattened ids: rows [t*B:(t+1)*B] belong to step t
    ids = token_ids.T.reshape(T * B, 1).astype(jnp.int32)

    full = lambda a: pl.BlockSpec(a.shape, lambda: (0,) * a.ndim)

    out = pl.pallas_call(
        encoder_kernel,
        out_shape=jax.ShapeDtypeStruct((B, OUT_PAD), jnp.float32),
        in_specs=[full(ids), full(emb_bf), full(wih_p), full(whh_p),
                  full(b_p), full(wmulv), full(bmulv)],
        out_specs=pl.BlockSpec((B, OUT_PAD), lambda: (0, 0)),
        scratch_shapes=[pltpu.VMEM((T * B, 4 * HP), jnp.float32)],   # X_proj buffer
    )(ids, emb_bf, wih_p, whh_p, b_p, wmulv, bmulv)

    return out[:, :LATENT], out[:, LATENT:2 * LATENT]


def encoder_reference(token_ids, params):
    """Pure-JAX f32 reference mirroring PyTorch nn.LSTM semantics."""
    emb_table, w_ih, w_hh, b_ih, b_hh, w_mu, b_mu, w_lv, b_lv = params
    x = jnp.take(emb_table, token_ids, axis=0)               # (B, T, E)
    B = x.shape[0]
    h0 = jnp.zeros((B, HIDDEN), jnp.float32)
    c0 = jnp.zeros((B, HIDDEN), jnp.float32)

    def step(carry, x_t):
        h, c = carry
        gates = x_t @ w_ih.T + b_ih + h @ w_hh.T + b_hh
        i, f, g, o = jnp.split(gates, 4, axis=-1)
        i, f, o = jax.nn.sigmoid(i), jax.nn.sigmoid(f), jax.nn.sigmoid(o)
        g = jnp.tanh(g)
        c = f * c + i * g
        h = o * jnp.tanh(c)
        return (h, c), None

    (h, _), _ = lax.scan(step, (h0, c0), jnp.transpose(x, (1, 0, 2)))
    return h @ w_mu.T + b_mu, h @ w_lv.T + b_lv


def init_params(key):
    ks = jax.random.split(key, 9)
    s = 0.1
    emb_table = jax.random.normal(ks[0], (VOCAB, EMB), jnp.float32) * s
    w_ih = jax.random.normal(ks[1], (4 * HIDDEN, EMB), jnp.float32) * s
    w_hh = jax.random.normal(ks[2], (4 * HIDDEN, HIDDEN), jnp.float32) * s
    b_ih = jax.random.normal(ks[3], (4 * HIDDEN,), jnp.float32) * s
    b_hh = jax.random.normal(ks[4], (4 * HIDDEN,), jnp.float32) * s
    w_mu = jax.random.normal(ks[5], (LATENT, HIDDEN), jnp.float32) * s
    b_mu = jax.random.normal(ks[6], (LATENT,), jnp.float32) * s
    w_lv = jax.random.normal(ks[7], (LATENT, HIDDEN), jnp.float32) * s
    b_lv = jax.random.normal(ks[8], (LATENT,), jnp.float32) * s
    return (emb_table, w_ih, w_hh, b_ih, b_hh, w_mu, b_mu, w_lv, b_lv)


if __name__ == "__main__":
    key = jax.random.PRNGKey(0)
    pkey, dkey = jax.random.split(key)
    params = init_params(pkey)
    token_ids = jax.random.randint(dkey, (BATCH, SEQ), 0, VOCAB, dtype=jnp.int32)

    mu, logvar = jax.jit(encoder_forward)(token_ids, params)
    jax.block_until_ready((mu, logvar))

    mu_ref, lv_ref = encoder_reference(token_ids, params)
    # bf16 MXU operands vs f32 reference -> loosened tolerance (as anticipated by review)
    np.testing.assert_allclose(np.asarray(mu), np.asarray(mu_ref), rtol=2e-2, atol=2e-2)
    np.testing.assert_allclose(np.asarray(logvar), np.asarray(lv_ref), rtol=2e-2, atol=2e-2)

    print("KERNEL_OK")
</pallas_src>

<mosaic_0001>
module attributes {stable_mosaic.version = 11 : i64} {
  func.func @encoder_kernel(%arg0: memref<80x1xi32, #tpu.memory_space<vmem>>, %arg1: memref<50x32xbf16, #tpu.memory_space<vmem>>, %arg2: memref<32x512xbf16, #tpu.memory_space<vmem>>, %arg3: memref<128x512xbf16, #tpu.memory_space<vmem>>, %arg4: memref<1x512xf32, #tpu.memory_space<vmem>>, %arg5: memref<128x128xbf16, #tpu.memory_space<vmem>>, %arg6: memref<1x128xf32, #tpu.memory_space<vmem>>, %arg7: memref<8x128xf32, #tpu.memory_space<vmem>>, %arg8: memref<80x512xf32, #tpu.memory_space<vmem>>) attributes {dimension_semantics = [], scalar_prefetch = 0 : i64, scratch_operands = 1 : i64, tpu.core_type = #tpu.core_type<tc>} {
    %c0 = arith.constant 0 : index
    %c0_0 = arith.constant 0 : index
    %0 = vector.load %arg0[%c0, %c0_0] : memref<80x1xi32, #tpu.memory_space<vmem>>, vector<80x1xi32>
    %1 = tpu.iota {dimensions = array<i32: 1>} : vector<80x50xi32>
    %2 = vector.broadcast %0 : vector<80x1xi32> to vector<80x50xi32>
    %3 = arith.cmpi eq, %2, %1 : vector<80x50xi32>
    %cst = arith.constant 1.000000e+00 : f32
    %cst_1 = arith.constant 0.000000e+00 : f32
    %4 = vector.broadcast %cst : f32 to vector<80x50xf32>
    %5 = vector.broadcast %cst_1 : f32 to vector<80x50xf32>
    %6 = arith.select %3, %4, %5 : vector<80x50xi1>, vector<80x50xf32>
    %7 = arith.truncf %6 : vector<80x50xf32> to vector<80x50xbf16>
    %c0_2 = arith.constant 0 : index
    %c0_3 = arith.constant 0 : index
    %8 = vector.load %arg1[%c0_2, %c0_3] : memref<50x32xbf16, #tpu.memory_space<vmem>>, vector<50x32xbf16>
    %cst_4 = arith.constant dense<0.000000e+00> : vector<80x32xf32>
    %9 = tpu.matmul %7, %8, %cst_4 {dimension_numbers = #tpu.dot_dimension_numbers<[1], [0], [0], [1], [0, 0, 1, 1], [], []>} : vector<80x50xbf16>, vector<50x32xbf16>, vector<80x32xf32> -> vector<80x32xf32>
    %10 = arith.truncf %9 : vector<80x32xf32> to vector<80x32xbf16>
    %c0_5 = arith.constant 0 : index
    %c0_6 = arith.constant 0 : index
    %11 = vector.load %arg2[%c0_5, %c0_6] : memref<32x512xbf16, #tpu.memory_space<vmem>>, vector<32x512xbf16>
    %cst_7 = arith.constant dense<0.000000e+00> : vector<80x512xf32>
    %12 = tpu.matmul %10, %11, %cst_7 {dimension_numbers = #tpu.dot_dimension_numbers<[1], [0], [0], [1], [0, 0, 1, 1], [], []>} : vector<80x32xbf16>, vector<32x512xbf16>, vector<80x512xf32> -> vector<80x512xf32>
    %c0_8 = arith.constant 0 : index
    %c0_9 = arith.constant 0 : index
    %13 = vector.load %arg4[%c0_8, %c0_9] : memref<1x512xf32, #tpu.memory_space<vmem>>, vector<1x512xf32>
    %14 = vector.broadcast %13 : vector<1x512xf32> to vector<80x512xf32>
    %15 = arith.addf %12, %14 : vector<80x512xf32>
    %c0_10 = arith.constant 0 : index
    %c0_11 = arith.constant 0 : index
    %16 = vector.load %arg8[%c0_10, %c0_11] : memref<80x512xf32, #tpu.memory_space<vmem>>, vector<80x512xf32>
    tpu.vector_store %arg8[%c0_10, %c0_11], %15 {strides = array<i32>} : memref<80x512xf32, #tpu.memory_space<vmem>>, vector<80x512xf32>,
    %c0_12 = arith.constant 0 : index
    %c0_13 = arith.constant 0 : index
    %17 = vector.load %arg3[%c0_12, %c0_13] : memref<128x512xbf16, #tpu.memory_space<vmem>>, vector<128x512xbf16>
    %cst_14 = arith.constant 0.000000e+00 : f32
    %18 = vector.broadcast %cst_14 : f32 to vector<8x128xf32>
    %cst_15 = arith.constant 0.000000e+00 : f32
    %19 = vector.broadcast %cst_15 : f32 to vector<8x128xf32>
    %c0_i32 = arith.constant 0 : i32
    %c8_i32 = arith.constant 8 : i32
    %20 = arith.muli %c0_i32, %c8_i32 : i32
    %21 = tpu.assume_multiple %20, 8 : i32
    %22 = arith.index_cast %21 : i32 to index
    %c0_16 = arith.constant 0 : index
    %23 = vector.load %arg8[%22, %c0_16] : memref<80x512xf32, #tpu.memory_space<vmem>>, vector<8x512xf32>
    %24 = arith.truncf %18 : vector<8x128xf32> to vector<8x128xbf16>
    %cst_17 = arith.constant dense<0.000000e+00> : vector<8x512xf32>
    %25 = tpu.matmul %24, %17, %cst_17 {dimension_numbers = #tpu.dot_dimension_numbers<[1], [0], [0], [1], [0, 0, 1, 1], [], []>} : vector<8x128xbf16>, vector<128x512xbf16>, vector<8x512xf32> -> vector<8x512xf32>
    %26 = arith.addf %23, %25 : vector<8x512xf32>
    %27 = vector.extract_strided_slice %26 {offsets = [0, 0], sizes = [8, 128], strides = [1, 1]} : vector<8x512xf32> to vector<8x128xf32>
    %28 = arith.negf %27 : vector<8x128xf32>
    %29 = math.exp %28 : vector<8x128xf32>
    %cst_18 = arith.constant 1.000000e+00 : f32
    %30 = vector.broadcast %cst_18 : f32 to vector<8x128xf32>
    %31 = arith.addf %30, %29 : vector<8x128xf32>
    %32 = arith.divf %30, %31 : vector<8x128xf32>
    %33 = vector.extract_strided_slice %26 {offsets = [0, 128], sizes = [8, 128], strides = [1, 1]} : vector<8x512xf32> to vector<8x128xf32>
    %34 = arith.negf %33 : vector<8x128xf32>
    %35 = math.exp %34 : vector<8x128xf32>
    %cst_19 = arith.constant 1.000000e+00 : f32
    %36 = vector.broadcast %cst_19 : f32 to vector<8x128xf32>
    %37 = arith.addf %36, %35 : vector<8x128xf32>
    %38 = arith.divf %36, %37 : vector<8x128xf32>
    %39 = vector.extract_strided_slice %26 {offsets = [0, 256], sizes = [8, 128], strides = [1, 1]} : vector<8x512xf32> to vector<8x128xf32>
    %40 = math.tanh %39 : vector<8x128xf32>
    %41 = vector.extract_strided_slice %26 {offsets = [0, 384], sizes = [8, 128], strides = [1, 1]} : vector<8x512xf32> to vector<8x128xf32>
    %42 = arith.negf %41 : vector<8x128xf32>
    %43 = math.exp %42 : vector<8x128xf32>
    %cst_20 = arith.constant 1.000000e+00 : f32
    %44 = vector.broadcast %cst_20 : f32 to vector<8x128xf32>
    %45 = arith.addf %44, %43 : vector<8x128xf32>
    %46 = arith.divf %44, %45 : vector<8x128xf32>
    %47 = arith.mulf %38, %19 : vector<8x128xf32>
    %48 = arith.mulf %32, %40 : vector<8x128xf32>
    %49 = arith.addf %47, %48 : vector<8x128xf32>
    %50 = math.tanh %49 : vector<8x128xf32>
    %51 = arith.mulf %46, %50 : vector<8x128xf32>
    %c1_i32 = arith.constant 1 : i32
    %c8_i32_21 = arith.constant 8 : i32
    %52 = arith.muli %c1_i32, %c8_i32_21 : i32
    %53 = tpu.assume_multiple %52, 8 : i32
    %54 = arith.index_cast %53 : i32 to index
    %c0_22 = arith.constant 0 : index
    %55 = vector.load %arg8[%54, %c0_22] : memref<80x512xf32, #tpu.memory_space<vmem>>, vector<8x512xf32>
    %56 = arith.truncf %51 : vector<8x128xf32> to vector<8x128xbf16>
    %cst_23 = arith.constant dense<0.000000e+00> : vector<8x512xf32>
    %57 = tpu.matmul %56, %17, %cst_23 {dimension_numbers = #tpu.dot_dimension_numbers<[1], [0], [0], [1], [0, 0, 1, 1], [], []>} : vector<8x128xbf16>, vector<128x512xbf16>, vector<8x512xf32> -> vector<8x512xf32>
    %58 = arith.addf %55, %57 : vector<8x512xf32>
    %59 = vector.extract_strided_slice %58 {offsets = [0, 0], sizes = [8, 128], strides = [1, 1]} : vector<8x512xf32> to vector<8x128xf32>
    %60 = arith.negf %59 : vector<8x128xf32>
    %61 = math.exp %60 : vector<8x128xf32>
    %cst_24 = arith.constant 1.000000e+00 : f32
    %62 = vector.broadcast %cst_24 : f32 to vector<8x128xf32>
    %63 = arith.addf %62, %61 : vector<8x128xf32>
    %64 = arith.divf %62, %63 : vector<8x128xf32>
    %65 = vector.extract_strided_slice %58 {offsets = [0, 128], sizes = [8, 128], strides = [1, 1]} : vector<8x512xf32> to vector<8x128xf32>
    %66 = arith.negf %65 : vector<8x128xf32>
    %67 = math.exp %66 : vector<8x128xf32>
    %cst_25 = arith.constant 1.000000e+00 : f32
    %68 = vector.broadcast %cst_25 : f32 to vector<8x128xf32>
    %69 = arith.addf %68, %67 : vector<8x128xf32>
    %70 = arith.divf %68, %69 : vector<8x128xf32>
    %71 = vector.extract_strided_slice %58 {offsets = [0, 256], sizes = [8, 128], strides = [1, 1]} : vector<8x512xf32> to vector<8x128xf32>
    %72 = math.tanh %71 : vector<8x128xf32>
    %73 = vector.extract_strided_slice %58 {offsets = [0, 384], sizes = [8, 128], strides = [1, 1]} : vector<8x512xf32> to vector<8x128xf32>
    %74 = arith.negf %73 : vector<8x128xf32>
    %75 = math.exp %74 : vector<8x128xf32>
    %cst_26 = arith.constant 1.000000e+00 : f32
    %76 = vector.broadcast %cst_26 : f32 to vector<8x128xf32>
    %77 = arith.addf %76, %75 : vector<8x128xf32>
    %78 = arith.divf %76, %77 : vector<8x128xf32>
    %79 = arith.mulf %70, %49 : vector<8x128xf32>
    %80 = arith.mulf %64, %72 : vector<8x128xf32>
    %81 = arith.addf %79, %80 : vector<8x128xf32>
    %82 = math.tanh %81 : vector<8x128xf32>
    %83 = arith.mulf %78, %82 : vector<8x128xf32>
    %c2_i32 = arith.constant 2 : i32
    %c8_i32_27 = arith.constant 8 : i32
    %84 = arith.muli %c2_i32, %c8_i32_27 : i32
    %85 = tpu.assume_multiple %84, 8 : i32
    %86 = arith.index_cast %85 : i32 to index
    %c0_28 = arith.constant 0 : index
    %87 = vector.load %arg8[%86, %c0_28] : memref<80x512xf32, #tpu.memory_space<vmem>>, vector<8x512xf32>
    %88 = arith.truncf %83 : vector<8x128xf32> to vector<8x128xbf16>
    %cst_29 = arith.constant dense<0.000000e+00> : vector<8x512xf32>
    %89 = tpu.matmul %88, %17, %cst_29 {dimension_numbers = #tpu.dot_dimension_numbers<[1], [0], [0], [1], [0, 0, 1, 1], [], []>} : vector<8x128xbf16>, vector<128x512xbf16>, vector<8x512xf32> -> vector<8x512xf32>
    %90 = arith.addf %87, %89 : vector<8x512xf32>
    %91 = vector.extract_strided_slice %90 {offsets = [0, 0], sizes = [8, 128], strides = [1, 1]} : vector<8x512xf32> to vector<8x128xf32>
    %92 = arith.negf %91 : vector<8x128xf32>
    %93 = math.exp %92 : vector<8x128xf32>
    %cst_30 = arith.constant 1.000000e+00 : f32
    %94 = vector.broadcast %cst_30 : f32 to vector<8x128xf32>
    %95 = arith.addf %94, %93 : vector<8x128xf32>
    %96 = arith.divf %94, %95 : vector<8x128xf32>
    %97 = vector.extract_strided_slice %90 {offsets = [0, 128], sizes = [8, 128], strides = [1, 1]} : vector<8x512xf32> to vector<8x128xf32>
    %98 = arith.negf %97 : vector<8x128xf32>
    %99 = math.exp %98 : vector<8x128xf32>
    %cst_31 = arith.constant 1.000000e+00 : f32
    %100 = vector.broadcast %cst_31 : f32 to vector<8x128xf32>
    %101 = arith.addf %100, %99 : vector<8x128xf32>
    %102 = arith.divf %100, %101 : vector<8x128xf32>
    %103 = vector.extract_strided_slice %90 {offsets = [0, 256], sizes = [8, 128], strides = [1, 1]} : vector<8x512xf32> to vector<8x128xf32>
    %104 = math.tanh %103 : vector<8x128xf32>
    %105 = vector.extract_strided_slice %90 {offsets = [0, 384], sizes = [8, 128], strides = [1, 1]} : vector<8x512xf32> to vector<8x128xf32>
    %106 = arith.negf %105 : vector<8x128xf32>
    %107 = math.exp %106 : vector<8x128xf32>
    %cst_32 = arith.constant 1.000000e+00 : f32
    %108 = vector.broadcast %cst_32 : f32 to vector<8x128xf32>
    %109 = arith.addf %108, %107 : vector<8x128xf32>
    %110 = arith.divf %108, %109 : vector<8x128xf32>
    %111 = arith.mulf %102, %81 : vector<8x128xf32>
    %112 = arith.mulf %96, %104 : vector<8x128xf32>
    %113 = arith.addf %111, %112 : vector<8x128xf32>
    %114 = math.tanh %113 : vector<8x128xf32>
    %115 = arith.mulf %110, %114 : vector<8x128xf32>
    %c3_i32 = arith.constant 3 : i32
    %c8_i32_33 = arith.constant 8 : i32
    %116 = arith.muli %c3_i32, %c8_i32_33 : i32
    %117 = tpu.assume_multiple %116, 8 : i32
    %118 = arith.index_cast %117 : i32 to index
    %c0_34 = arith.constant 0 : index
    %119 = vector.load %arg8[%118, %c0_34] : memref<80x512xf32, #tpu.memory_space<vmem>>, vector<8x512xf32>
    %120 = arith.truncf %115 : vector<8x128xf32> to vector<8x128xbf16>
    %cst_35 = arith.constant dense<0.000000e+00> : vector<8x512xf32>
    %121 = tpu.matmul %120, %17, %cst_35 {dimension_numbers = #tpu.dot_dimension_numbers<[1], [0], [0], [1], [0, 0, 1, 1], [], []>} : vector<8x128xbf16>, vector<128x512xbf16>, vector<8x512xf32> -> vector<8x512xf32>
    %122 = arith.addf %119, %121 : vector<8x512xf32>
    %123 = vector.extract_strided_slice %122 {offsets = [0, 0], sizes = [8, 128], strides = [1, 1]} : vector<8x512xf32> to vector<8x128xf32>
    %124 = arith.negf %123 : vector<8x128xf32>
    %125 = math.exp %124 : vector<8x128xf32>
    %cst_36 = arith.constant 1.000000e+00 : f32
    %126 = vector.broadcast %cst_36 : f32 to vector<8x128xf32>
    %127 = arith.addf %126, %125 : vector<8x128xf32>
    %128 = arith.divf %126, %127 : vector<8x128xf32>
    %129 = vector.extract_strided_slice %122 {offsets = [0, 128], sizes = [8, 128], strides = [1, 1]} : vector<8x512xf32> to vector<8x128xf32>
    %130 = arith.negf %129 : vector<8x128xf32>
    %131 = math.exp %130 : vector<8x128xf32>
    %cst_37 = arith.constant 1.000000e+00 : f32
    %132 = vector.broadcast %cst_37 : f32 to vector<8x128xf32>
    %133 = arith.addf %132, %131 : vector<8x128xf32>
    %134 = arith.divf %132, %133 : vector<8x128xf32>
    %135 = vector.extract_strided_slice %122 {offsets = [0, 256], sizes = [8, 128], strides = [1, 1]} : vector<8x512xf32> to vector<8x128xf32>
    %136 = math.tanh %135 : vector<8x128xf32>
    %137 = vector.extract_strided_slice %122 {offsets = [0, 384], sizes = [8, 128], strides = [1, 1]} : vector<8x512xf32> to vector<8x128xf32>
    %138 = arith.negf %137 : vector<8x128xf32>
    %139 = math.exp %138 : vector<8x128xf32>
    %cst_38 = arith.constant 1.000000e+00 : f32
    %140 = vector.broadcast %cst_38 : f32 to vector<8x128xf32>
    %141 = arith.addf %140, %139 : vector<8x128xf32>
    %142 = arith.divf %140, %141 : vector<8x128xf32>
    %143 = arith.mulf %134, %113 : vector<8x128xf32>
    %144 = arith.mulf %128, %136 : vector<8x128xf32>
    %145 = arith.addf %143, %144 : vector<8x128xf32>
    %146 = math.tanh %145 : vector<8x128xf32>
    %147 = arith.mulf %142, %146 : vector<8x128xf32>
    %c4_i32 = arith.constant 4 : i32
    %c8_i32_39 = arith.constant 8 : i32
    %148 = arith.muli %c4_i32, %c8_i32_39 : i32
    %149 = tpu.assume_multiple %148, 8 : i32
    %150 = arith.index_cast %149 : i32 to index
    %c0_40 = arith.constant 0 : index
    %151 = vector.load %arg8[%150, %c0_40] : memref<80x512xf32, #tpu.memory_space<vmem>>, vector<8x512xf32>
    %152 = arith.truncf %147 : vector<8x128xf32> to vector<8x128xbf16>
    %cst_41 = arith.constant dense<0.000000e+00> : vector<8x512xf32>
    %153 = tpu.matmul %152, %17, %cst_41 {dimension_numbers = #tpu.dot_dimension_numbers<[1], [0], [0], [1], [0, 0, 1, 1], [], []>} : vector<8x128xbf16>, vector<128x512xbf16>, vector<8x512xf32> -> vector<8x512xf32>
    %154 = arith.addf %151, %153 : vector<8x512xf32>
    %155 = vector.extract_strided_slice %154 {offsets = [0, 0], sizes = [8, 128], strides = [1, 1]} : vector<8x512xf32> to vector<8x128xf32>
    %156 = arith.negf %155 : vector<8x128xf32>
    %157 = math.exp %156 : vector<8x128xf32>
    %cst_42 = arith.constant 1.000000e+00 : f32
    %158 = vector.broadcast %cst_42 : f32 to vector<8x128xf32>
    %159 = arith.addf %158, %157 : vector<8x128xf32>
    %160 = arith.divf %158, %159 : vector<8x128xf32>
    %161 = vector.extract_strided_slice %154 {offsets = [0, 128], sizes = [8, 128], strides = [1, 1]} : vector<8x512xf32> to vector<8x128xf32>
    %162 = arith.negf %161 : vector<8x128xf32>
    %163 = math.exp %162 : vector<8x128xf32>
    %cst_43 = arith.constant 1.000000e+00 : f32
    %164 = vector.broadcast %cst_43 : f32 to vector<8x128xf32>
    %165 = arith.addf %164, %163 : vector<8x128xf32>
    %166 = arith.divf %164, %165 : vector<8x128xf32>
    %167 = vector.extract_strided_slice %154 {offsets = [0, 256], sizes = [8, 128], strides = [1, 1]} : vector<8x512xf32> to vector<8x128xf32>
    %168 = math.tanh %167 : vector<8x128xf32>
    %169 = vector.extract_strided_slice %154 {offsets = [0, 384], sizes = [8, 128], strides = [1, 1]} : vector<8x512xf32> to vector<8x128xf32>
    %170 = arith.negf %169 : vector<8x128xf32>
    %171 = math.exp %170 : vector<8x128xf32>
    %cst_44 = arith.constant 1.000000e+00 : f32
    %172 = vector.broadcast %cst_44 : f32 to vector<8x128xf32>
    %173 = arith.addf %172, %171 : vector<8x128xf32>
    %174 = arith.divf %172, %173 : vector<8x128xf32>
    %175 = arith.mulf %166, %145 : vector<8x128xf32>
    %176 = arith.mulf %160, %168 : vector<8x128xf32>
    %177 = arith.addf %175, %176 : vector<8x128xf32>
    %178 = math.tanh %177 : vector<8x128xf32>
    %179 = arith.mulf %174, %178 : vector<8x128xf32>
    %c5_i32 = arith.constant 5 : i32
    %c8_i32_45 = arith.constant 8 : i32
    %180 = arith.muli %c5_i32, %c8_i32_45 : i32
    %181 = tpu.assume_multiple %180, 8 : i32
    %182 = arith.index_cast %181 : i32 to index
    %c0_46 = arith.constant 0 : index
    %183 = vector.load %arg8[%182, %c0_46] : memref<80x512xf32, #tpu.memory_space<vmem>>, vector<8x512xf32>
    %184 = arith.truncf %179 : vector<8x128xf32> to vector<8x128xbf16>
    %cst_47 = arith.constant dense<0.000000e+00> : vector<8x512xf32>
    %185 = tpu.matmul %184, %17, %cst_47 {dimension_numbers = #tpu.dot_dimension_numbers<[1], [0], [0], [1], [0, 0, 1, 1], [], []>} : vector<8x128xbf16>, vector<128x512xbf16>, vector<8x512xf32> -> vector<8x512xf32>
    %186 = arith.addf %183, %185 : vector<8x512xf32>
    %187 = vector.extract_strided_slice %186 {offsets = [0, 0], sizes = [8, 128], strides = [1, 1]} : vector<8x512xf32> to vector<8x128xf32>
    %188 = arith.negf %187 : vector<8x128xf32>
    %189 = math.exp %188 : vector<8x128xf32>
    %cst_48 = arith.constant 1.000000e+00 : f32
    %190 = vector.broadcast %cst_48 : f32 to vector<8x128xf32>
    %191 = arith.addf %190, %189 : vector<8x128xf32>
    %192 = arith.divf %190, %191 : vector<8x128xf32>
    %193 = vector.extract_strided_slice %186 {offsets = [0, 128], sizes = [8, 128], strides = [1, 1]} : vector<8x512xf32> to vector<8x128xf32>
    %194 = arith.negf %193 : vector<8x128xf32>
    %195 = math.exp %194 : vector<8x128xf32>
    %cst_49 = arith.constant 1.000000e+00 : f32
    %196 = vector.broadcast %cst_49 : f32 to vector<8x128xf32>
    %197 = arith.addf %196, %195 : vector<8x128xf32>
    %198 = arith.divf %196, %197 : vector<8x128xf32>
    %199 = vector.extract_strided_slice %186 {offsets = [0, 256], sizes = [8, 128], strides = [1, 1]} : vector<8x512xf32> to vector<8x128xf32>
    %200 = math.tanh %199 : vector<8x128xf32>
    %201 = vector.extract_strided_slice %186 {offsets = [0, 384], sizes = [8, 128], strides = [1, 1]} : vector<8x512xf32> to vector<8x128xf32>
    %202 = arith.negf %201 : vector<8x128xf32>
    %203 = math.exp %202 : vector<8x128xf32>
    %cst_50 = arith.constant 1.000000e+00 : f32
    %204 = vector.broadcast %cst_50 : f32 to vector<8x128xf32>
    %205 = arith.addf %204, %203 : vector<8x128xf32>
    %206 = arith.divf %204, %205 : vector<8x128xf32>
    %207 = arith.mulf %198, %177 : vector<8x128xf32>
    %208 = arith.mulf %192, %200 : vector<8x128xf32>
    %209 = arith.addf %207, %208 : vector<8x128xf32>
    %210 = math.tanh %209 : vector<8x128xf32>
    %211 = arith.mulf %206, %210 : vector<8x128xf32>
    %c6_i32 = arith.constant 6 : i32
    %c8_i32_51 = arith.constant 8 : i32
    %212 = arith.muli %c6_i32, %c8_i32_51 : i32
    %213 = tpu.assume_multiple %212, 8 : i32
    %214 = arith.index_cast %213 : i32 to index
    %c0_52 = arith.constant 0 : index
    %215 = vector.load %arg8[%214, %c0_52] : memref<80x512xf32, #tpu.memory_space<vmem>>, vector<8x512xf32>
    %216 = arith.truncf %211 : vector<8x128xf32> to vector<8x128xbf16>
    %cst_53 = arith.constant dense<0.000000e+00> : vector<8x512xf32>
    %217 = tpu.matmul %216, %17, %cst_53 {dimension_numbers = #tpu.dot_dimension_numbers<[1], [0], [0], [1], [0, 0, 1, 1], [], []>} : vector<8x128xbf16>, vector<128x512xbf16>, vector<8x512xf32> -> vector<8x512xf32>
    %218 = arith.addf %215, %217 : vector<8x512xf32>
    %219 = vector.extract_strided_slice %218 {offsets = [0, 0], sizes = [8, 128], strides = [1, 1]} : vector<8x512xf32> to vector<8x128xf32>
    %220 = arith.negf %219 : vector<8x128xf32>
    %221 = math.exp %220 : vector<8x128xf32>
    %cst_54 = arith.constant 1.000000e+00 : f32
    %222 = vector.broadcast %cst_54 : f32 to vector<8x128xf32>
    %223 = arith.addf %222, %221 : vector<8x128xf32>
    %224 = arith.divf %222, %223 : vector<8x128xf32>
    %225 = vector.extract_strided_slice %218 {offsets = [0, 128], sizes = [8, 128], strides = [1, 1]} : vector<8x512xf32> to vector<8x128xf32>
    %226 = arith.negf %225 : vector<8x128xf32>
    %227 = math.exp %226 : vector<8x128xf32>
    %cst_55 = arith.constant 1.000000e+00 : f32
    %228 = vector.broadcast %cst_55 : f32 to vector<8x128xf32>
    %229 = arith.addf %228, %227 : vector<8x128xf32>
    %230 = arith.divf %228, %229 : vector<8x128xf32>
    %231 = vector.extract_strided_slice %218 {offsets = [0, 256], sizes = [8, 128], strides = [1, 1]} : vector<8x512xf32> to vector<8x128xf32>
    %232 = math.tanh %231 : vector<8x128xf32>
    %233 = vector.extract_strided_slice %218 {offsets = [0, 384], sizes = [8, 128], strides = [1, 1]} : vector<8x512xf32> to vector<8x128xf32>
    %234 = arith.negf %233 : vector<8x128xf32>
    %235 = math.exp %234 : vector<8x128xf32>
    %cst_56 = arith.constant 1.000000e+00 : f32
    %236 = vector.broadcast %cst_56 : f32 to vector<8x128xf32>
    %237 = arith.addf %236, %235 : vector<8x128xf32>
    %238 = arith.divf %236, %237 : vector<8x128xf32>
    %239 = arith.mulf %230, %209 : vector<8x128xf32>
    %240 = arith.mulf %224, %232 : vector<8x128xf32>
    %241 = arith.addf %239, %240 : vector<8x128xf32>
    %242 = math.tanh %241 : vector<8x128xf32>
    %243 = arith.mulf %238, %242 : vector<8x128xf32>
    %c7_i32 = arith.constant 7 : i32
    %c8_i32_57 = arith.constant 8 : i32
    %244 = arith.muli %c7_i32, %c8_i32_57 : i32
    %245 = tpu.assume_multiple %244, 8 : i32
    %246 = arith.index_cast %245 : i32 to index
    %c0_58 = arith.constant 0 : index
    %247 = vector.load %arg8[%246, %c0_58] : memref<80x512xf32, #tpu.memory_space<vmem>>, vector<8x512xf32>
    %248 = arith.truncf %243 : vector<8x128xf32> to vector<8x128xbf16>
    %cst_59 = arith.constant dense<0.000000e+00> : vector<8x512xf32>
    %249 = tpu.matmul %248, %17, %cst_59 {dimension_numbers = #tpu.dot_dimension_numbers<[1], [0], [0], [1], [0, 0, 1, 1], [], []>} : vector<8x128xbf16>, vector<128x512xbf16>, vector<8x512xf32> -> vector<8x512xf32>
    %250 = arith.addf %247, %249 : vector<8x512xf32>
    %251 = vector.extract_strided_slice %250 {offsets = [0, 0], sizes = [8, 128], strides = [1, 1]} : vector<8x512xf32> to vector<8x128xf32>
    %252 = arith.negf %251 : vector<8x128xf32>
    %253 = math.exp %252 : vector<8x128xf32>
    %cst_60 = arith.constant 1.000000e+00 : f32
    %254 = vector.broadcast %cst_60 : f32 to vector<8x128xf32>
    %255 = arith.addf %254, %253 : vector<8x128xf32>
    %256 = arith.divf %254, %255 : vector<8x128xf32>
    %257 = vector.extract_strided_slice %250 {offsets = [0, 128], sizes = [8, 128], strides = [1, 1]} : vector<8x512xf32> to vector<8x128xf32>
    %258 = arith.negf %257 : vector<8x128xf32>
    %259 = math.exp %258 : vector<8x128xf32>
    %cst_61 = arith.constant 1.000000e+00 : f32
    %260 = vector.broadcast %cst_61 : f32 to vector<8x128xf32>
    %261 = arith.addf %260, %259 : vector<8x128xf32>
    %262 = arith.divf %260, %261 : vector<8x128xf32>
    %263 = vector.extract_strided_slice %250 {offsets = [0, 256], sizes = [8, 128], strides = [1, 1]} : vector<8x512xf32> to vector<8x128xf32>
    %264 = math.tanh %263 : vector<8x128xf32>
    %265 = vector.extract_strided_slice %250 {offsets = [0, 384], sizes = [8, 128], strides = [1, 1]} : vector<8x512xf32> to vector<8x128xf32>
    %266 = arith.negf %265 : vector<8x128xf32>
    %267 = math.exp %266 : vector<8x128xf32>
    %cst_62 = arith.constant 1.000000e+00 : f32
    %268 = vector.broadcast %cst_62 : f32 to vector<8x128xf32>
    %269 = arith.addf %268, %267 : vector<8x128xf32>
    %270 = arith.divf %268, %269 : vector<8x128xf32>
    %271 = arith.mulf %262, %241 : vector<8x128xf32>
    %272 = arith.mulf %256, %264 : vector<8x128xf32>
    %273 = arith.addf %271, %272 : vector<8x128xf32>
    %274 = math.tanh %273 : vector<8x128xf32>
    %275 = arith.mulf %270, %274 : vector<8x128xf32>
    %c8_i32_63 = arith.constant 8 : i32
    %c8_i32_64 = arith.constant 8 : i32
    %276 = arith.muli %c8_i32_63, %c8_i32_64 : i32
    %277 = tpu.assume_multiple %276, 8 : i32
    %278 = arith.index_cast %277 : i32 to index
    %c0_65 = arith.constant 0 : index
    %279 = vector.load %arg8[%278, %c0_65] : memref<80x512xf32, #tpu.memory_space<vmem>>, vector<8x512xf32>
    %280 = arith.truncf %275 : vector<8x128xf32> to vector<8x128xbf16>
    %cst_66 = arith.constant dense<0.000000e+00> : vector<8x512xf32>
    %281 = tpu.matmul %280, %17, %cst_66 {dimension_numbers = #tpu.dot_dimension_numbers<[1], [0], [0], [1], [0, 0, 1, 1], [], []>} : vector<8x128xbf16>, vector<128x512xbf16>, vector<8x512xf32> -> vector<8x512xf32>
    %282 = arith.addf %279, %281 : vector<8x512xf32>
    %283 = vector.extract_strided_slice %282 {offsets = [0, 0], sizes = [8, 128], strides = [1, 1]} : vector<8x512xf32> to vector<8x128xf32>
    %284 = arith.negf %283 : vector<8x128xf32>
    %285 = math.exp %284 : vector<8x128xf32>
    %cst_67 = arith.constant 1.000000e+00 : f32
    %286 = vector.broadcast %cst_67 : f32 to vector<8x128xf32>
    %287 = arith.addf %286, %285 : vector<8x128xf32>
    %288 = arith.divf %286, %287 : vector<8x128xf32>
    %289 = vector.extract_strided_slice %282 {offsets = [0, 128], sizes = [8, 128], strides = [1, 1]} : vector<8x512xf32> to vector<8x128xf32>
    %290 = arith.negf %289 : vector<8x128xf32>
    %291 = math.exp %290 : vector<8x128xf32>
    %cst_68 = arith.constant 1.000000e+00 : f32
    %292 = vector.broadcast %cst_68 : f32 to vector<8x128xf32>
    %293 = arith.addf %292, %291 : vector<8x128xf32>
    %294 = arith.divf %292, %293 : vector<8x128xf32>
    %295 = vector.extract_strided_slice %282 {offsets = [0, 256], sizes = [8, 128], strides = [1, 1]} : vector<8x512xf32> to vector<8x128xf32>
    %296 = math.tanh %295 : vector<8x128xf32>
    %297 = vector.extract_strided_slice %282 {offsets = [0, 384], sizes = [8, 128], strides = [1, 1]} : vector<8x512xf32> to vector<8x128xf32>
    %298 = arith.negf %297 : vector<8x128xf32>
    %299 = math.exp %298 : vector<8x128xf32>
    %cst_69 = arith.constant 1.000000e+00 : f32
    %300 = vector.broadcast %cst_69 : f32 to vector<8x128xf32>
    %301 = arith.addf %300, %299 : vector<8x128xf32>
    %302 = arith.divf %300, %301 : vector<8x128xf32>
    %303 = arith.mulf %294, %273 : vector<8x128xf32>
    %304 = arith.mulf %288, %296 : vector<8x128xf32>
    %305 = arith.addf %303, %304 : vector<8x128xf32>
    %306 = math.tanh %305 : vector<8x128xf32>
    %307 = arith.mulf %302, %306 : vector<8x128xf32>
    %c9_i32 = arith.constant 9 : i32
    %c8_i32_70 = arith.constant 8 : i32
    %308 = arith.muli %c9_i32, %c8_i32_70 : i32
    %309 = tpu.assume_multiple %308, 8 : i32
    %310 = arith.index_cast %309 : i32 to index
    %c0_71 = arith.constant 0 : index
    %311 = vector.load %arg8[%310, %c0_71] : memref<80x512xf32, #tpu.memory_space<vmem>>, vector<8x512xf32>
    %312 = arith.truncf %307 : vector<8x128xf32> to vector<8x128xbf16>
    %cst_72 = arith.constant dense<0.000000e+00> : vector<8x512xf32>
    %313 = tpu.matmul %312, %17, %cst_72 {dimension_numbers = #tpu.dot_dimension_numbers<[1], [0], [0], [1], [0, 0, 1, 1], [], []>} : vector<8x128xbf16>, vector<128x512xbf16>, vector<8x512xf32> -> vector<8x512xf32>
    %314 = arith.addf %311, %313 : vector<8x512xf32>
    %315 = vector.extract_strided_slice %314 {offsets = [0, 0], sizes = [8, 128], strides = [1, 1]} : vector<8x512xf32> to vector<8x128xf32>
    %316 = arith.negf %315 : vector<8x128xf32>
    %317 = math.exp %316 : vector<8x128xf32>
    %cst_73 = arith.constant 1.000000e+00 : f32
    %318 = vector.broadcast %cst_73 : f32 to vector<8x128xf32>
    %319 = arith.addf %318, %317 : vector<8x128xf32>
    %320 = arith.divf %318, %319 : vector<8x128xf32>
    %321 = vector.extract_strided_slice %314 {offsets = [0, 128], sizes = [8, 128], strides = [1, 1]} : vector<8x512xf32> to vector<8x128xf32>
    %322 = arith.negf %321 : vector<8x128xf32>
    %323 = math.exp %322 : vector<8x128xf32>
    %cst_74 = arith.constant 1.000000e+00 : f32
    %324 = vector.broadcast %cst_74 : f32 to vector<8x128xf32>
    %325 = arith.addf %324, %323 : vector<8x128xf32>
    %326 = arith.divf %324, %325 : vector<8x128xf32>
    %327 = vector.extract_strided_slice %314 {offsets = [0, 256], sizes = [8, 128], strides = [1, 1]} : vector<8x512xf32> to vector<8x128xf32>
    %328 = math.tanh %327 : vector<8x128xf32>
    %329 = vector.extract_strided_slice %314 {offsets = [0, 384], sizes = [8, 128], strides = [1, 1]} : vector<8x512xf32> to vector<8x128xf32>
    %330 = arith.negf %329 : vector<8x128xf32>
    %331 = math.exp %330 : vector<8x128xf32>
    %cst_75 = arith.constant 1.000000e+00 : f32
    %332 = vector.broadcast %cst_75 : f32 to vector<8x128xf32>
    %333 = arith.addf %332, %331 : vector<8x128xf32>
    %334 = arith.divf %332, %333 : vector<8x128xf32>
    %335 = arith.mulf %326, %305 : vector<8x128xf32>
    %336 = arith.mulf %320, %328 : vector<8x128xf32>
    %337 = arith.addf %335, %336 : vector<8x128xf32>
    %338 = math.tanh %337 : vector<8x128xf32>
    %339 = arith.mulf %334, %338 : vector<8x128xf32>
    %c10_i32 = arith.constant 10 : i32
    %340 = arith.truncf %339 : vector<8x128xf32> to vector<8x128xbf16>
    %c0_76 = arith.constant 0 : index
    %c0_77 = arith.constant 0 : index
    %341 = vector.load %arg5[%c0_76, %c0_77] : memref<128x128xbf16, #tpu.memory_space<vmem>>, vector<128x128xbf16>
    %cst_78 = arith.constant dense<0.000000e+00> : vector<8x128xf32>
    %342 = tpu.matmul %340, %341, %cst_78 {dimension_numbers = #tpu.dot_dimension_numbers<[1], [0], [0], [1], [0, 0, 1, 1], [], []>} : vector<8x128xbf16>, vector<128x128xbf16>, vector<8x128xf32> -> vector<8x128xf32>
    %c0_79 = arith.constant 0 : index
    %c0_80 = arith.constant 0 : index
    %343 = vector.load %arg6[%c0_79, %c0_80] : memref<1x128xf32, #tpu.memory_space<vmem>>, vector<1x128xf32>
    %344 = vector.broadcast %343 : vector<1x128xf32> to vector<8x128xf32>
    %345 = arith.addf %342, %344 : vector<8x128xf32>
    %c0_81 = arith.constant 0 : index
    %c0_82 = arith.constant 0 : index
    %346 = vector.load %arg7[%c0_81, %c0_82] : memref<8x128xf32, #tpu.memory_space<vmem>>, vector<8x128xf32>
    tpu.vector_store %arg7[%c0_81, %c0_82], %345 {strides = array<i32>} : memref<8x128xf32, #tpu.memory_space<vmem>>, vector<8x128xf32>,
    return
  }
}

</mosaic_0001>

<llo_original>
// kernel: encoder_forward.1
$region0: #{encoder_forward.1}
  #allocation0 [shape = 'u32[]', space=smem, size = 0x4, offset = 0x4, fixed_abs, tag = 'smem constant byte address 0x4 - core index']
  #allocation1 [shape = 'u32[144,128]{1,0:T(1,128)}', space=vmem, size = 0x12000, scoped, tag = 'internal scratch']
  #allocation2 [shape = 'f32[80,512]{1,0:T(8,128)}', space=vmem, size = 0x28000, scoped, tag = 'scratch operand']
  %s0 = inlined_call_operand.vmem [shape: s32[80,1], index: 0, kind: input, shape index: {}]
  %s1 = inlined_call_operand.vmem [shape: bf16[50,32], index: 1, kind: input, shape index: {}]
  %s2 = inlined_call_operand.vmem [shape: bf16[32,512], index: 2, kind: input, shape index: {}]
  %s3 = inlined_call_operand.vmem [shape: bf16[128,512], index: 3, kind: input, shape index: {}]
  %s4 = inlined_call_operand.vmem [shape: f32[1,512], index: 4, kind: input, shape index: {}]
  %s5 = inlined_call_operand.vmem [shape: bf16[128,128], index: 5, kind: input, shape index: {}]
  %s6 = inlined_call_operand.vmem [shape: f32[1,128], index: 6, kind: input, shape index: {}]
  %s7 = inlined_call_operand.vmem [shape: f32[8,128], index: 7, kind: output, shape index: {}]
  %s8 = sld [smem:[#allocation0]]
  $region38: #{encoder_forward.1} parent=0
    _
  %s10 = ssub.s32 1, %s8
  %s11 = scalar_select 0, %s10, %s8
  // Predicated region
  $region2: #{encoder_forward.1} parent=0 // pred_check
    _
  $region3: #{encoder_forward.1} parent=0 // pred_check_branch
    %13 = sbr.rel (0) target = $region5
  $region4: #{encoder_forward.1} parent=0 // pred_region
    _
  $region5: #{encoder_forward.1} parent=0 // pred_fallthru
    _
  // Predicated region
  $region6: #{encoder_forward.1} parent=0 // pred_check
    _
  $region7: #{encoder_forward.1} parent=0 // pred_check_branch
    %15 = sbr.rel (0) target = $region9
  $region8: #{encoder_forward.1} parent=0 // pred_region
    _
  $region9: #{encoder_forward.1} parent=0 // pred_fallthru
    _
  // Predicated region
  $region10: #{encoder_forward.1} parent=0 // pred_check
    _
  $region11: #{encoder_forward.1} parent=0 // pred_check_branch
    %17 = sbr.rel (0) target = $region13
  $region12: #{encoder_forward.1} parent=0 // pred_region
    _
  $region13: #{encoder_forward.1} parent=0 // pred_fallthru
    _
  // Predicated region
  $region14: #{encoder_forward.1} parent=0 // pred_check
    _
  $region15: #{encoder_forward.1} parent=0 // pred_check_branch
    %19 = sbr.rel (0) target = $region17
  $region16: #{encoder_forward.1} parent=0 // pred_region
    _
  $region17: #{encoder_forward.1} parent=0 // pred_fallthru
    _
  // Predicated region
  $region18: #{encoder_forward.1} parent=0 // pred_check
    _
  $region19: #{encoder_forward.1} parent=0 // pred_check_branch
    %21 = sbr.rel (0) target = $region21
  $region20: #{encoder_forward.1} parent=0 // pred_region
    _
  $region21: #{encoder_forward.1} parent=0 // pred_fallthru
    _
  // Predicated region
  $region22: #{encoder_forward.1} parent=0 // pred_check
    _
  $region23: #{encoder_forward.1} parent=0 // pred_check_branch
    %23 = sbr.rel (0) target = $region25
  $region24: #{encoder_forward.1} parent=0 // pred_region
    _
  $region25: #{encoder_forward.1} parent=0 // pred_fallthru
    _
  // Predicated region
  $region26: #{encoder_forward.1} parent=0 // pred_check
    _
  $region27: #{encoder_forward.1} parent=0 // pred_check_branch
    %25 = sbr.rel (0) target = $region29
  $region28: #{encoder_forward.1} parent=0 // pred_region
    _
  $region29: #{encoder_forward.1} parent=0 // pred_fallthru
    _
  %v27 = vld [vmem:[%s0] sm:$0xff]
  %v28 = vld [vmem:[%s0 + $0x8] sm:$0xff]
  %v29 = vld [vmem:[%s0 + $0x10] sm:$0xff]
  %v30 = vld [vmem:[%s0 + $0x18] sm:$0xff]
  %v31 = vld [vmem:[%s0 + $0x20] sm:$0xff]
  %v32 = vld [vmem:[%s0 + $0x28] sm:$0xff]
  %v33 = vld [vmem:[%s0 + $0x30] sm:$0xff]
  %v34 = vld [vmem:[%s0 + $0x38] sm:$0xff]
  %v35 = vld [vmem:[%s0 + $0x40] sm:$0xff]
  %v36 = vld [vmem:[%s0 + $0x48] sm:$0xff]
  %v37 = vlaneseq
  %v38 = vand.u32 %v37, 127
  %39 = vset.pattern.permute.xlu0 0
  %40 = vperm.xlu0 %39, %v27
  %v41 = vpop.permute.xlu0 %40
  %42 = vset.pattern.permute.xlu0 0
  %43 = vperm.xlu0 %42, %v28
  %v44 = vpop.permute.xlu0 %43
  %45 = vset.pattern.permute.xlu0 0
  %46 = vperm.xlu0 %45, %v29
  %v47 = vpop.permute.xlu0 %46
  %48 = vset.pattern.permute.xlu0 0
  %49 = vperm.xlu0 %48, %v30
  %v50 = vpop.permute.xlu0 %49
  %51 = vset.pattern.permute.xlu0 0
  %52 = vperm.xlu0 %51, %v31
  %v53 = vpop.permute.xlu0 %52
  %54 = vset.pattern.permute.xlu0 0
  %55 = vperm.xlu0 %54, %v32
  %v56 = vpop.permute.xlu0 %55
  %57 = vset.pattern.permute.xlu0 0
  %58 = vperm.xlu0 %57, %v33
  %v59 = vpop.permute.xlu0 %58
  %60 = vset.pattern.permute.xlu0 0
  %61 = vperm.xlu0 %60, %v34
  %v62 = vpop.permute.xlu0 %61
  %63 = vset.pattern.permute.xlu0 0
  %64 = vperm.xlu0 %63, %v35
  %v65 = vpop.permute.xlu0 %64
  %66 = vset.pattern.permute.xlu0 0
  %67 = vperm.xlu0 %66, %v36
  %v68 = vpop.permute.xlu0 %67
  %vm69 = vcmp.eq.s32.totalorder %v41, %v38
  %vm70 = vcmp.eq.s32.totalorder %v44, %v38
  %vm71 = vcmp.eq.s32.totalorder %v47, %v38
  %vm72 = vcmp.eq.s32.totalorder %v50, %v38
  %vm73 = vcmp.eq.s32.totalorder %v53, %v38
  %vm74 = vcmp.eq.s32.totalorder %v56, %v38
  %vm75 = vcmp.eq.s32.totalorder %v59, %v38
  %vm76 = vcmp.eq.s32.totalorder %v62, %v38
  %vm77 = vcmp.eq.s32.totalorder %v65, %v38
  %vm78 = vcmp.eq.s32.totalorder %v68, %v38
  %v79 = vsel %vm69, 1.0, 0.0
  %v80 = vsel %vm70, 1.0, 0.0
  %v81 = vsel %vm71, 1.0, 0.0
  %v82 = vsel %vm72, 1.0, 0.0
  %v83 = vsel %vm73, 1.0, 0.0
  %v84 = vsel %vm74, 1.0, 0.0
  %v85 = vsel %vm75, 1.0, 0.0
  %v86 = vsel %vm76, 1.0, 0.0
  %v87 = vsel %vm77, 1.0, 0.0
  %v88 = vsel %vm78, 1.0, 0.0
  %v89 = vpack.c.bf16 %v80, %v79
  %v90 = vpack.c.bf16 %v82, %v81
  %v91 = vpack.c.bf16 %v84, %v83
  %v92 = vpack.c.bf16 %v86, %v85
  %v93 = vpack.c.bf16 %v88, %v87
  %v94 = vld [vmem:[%s1] sm:$0xf]
  %v95 = vld [vmem:[%s1 + $0x4] sm:$0xf]
  %v96 = vld [vmem:[%s1 + $0x8] sm:$0xf]
  %v97 = vld [vmem:[%s1 + $0xc] sm:$0xf]
  %v98 = vld [vmem:[%s1 + $0x10] sm:$0xf]
  %v99 = vld [vmem:[%s1 + $0x14] sm:$0xf]
  %v100 = vld [vmem:[%s1 + $0x18] sm:$0x1]
  %v108 = vunpack.c.l.b16 %v94
  %v109 = vunpack.c.l.b16 %v95
  %v110 = vunpack.c.l.b16 %v96
  %v111 = vunpack.c.l.b16 %v97
  %v112 = vunpack.c.l.b16 %v98
  %v113 = vunpack.c.l.b16 %v99
  %v114 = vunpack.c.l.b16 %v100
  %v115 = vpack.c.b16 %v109, %v108
  %v116 = vpack.c.b16 %v111, %v110
  %v117 = vpack.c.b16 %v113, %v112
  %v118 = vpack.c.b16 %v114, %v114
  %vm122 = vcmask 408576
  %v124 = vsel %vm122, %v89, 0
  %v127 = vsel %vm122, %v90, 0
  %v130 = vsel %vm122, %v91, 0
  %v133 = vsel %vm122, %v92, 0
  %v136 = vsel %vm122, %v93, 0
  %vm138 = vcmask 1040384
  %v140 = vsel %vm138, %v118, 0
  %142 = vmatprep.subr.bf16.mxu0 0
  %143 = vmatpush1.bf16.msra.mxu0 %v115
  %144 = vmatprep.subr.bf16.mxu0 0
  %145 = vmatpush1.bf16.msra.mxu0 %v116
  %146 = vmatprep.subr.bf16.mxu0 0
  %147 = vmatpush1.bf16.msra.mxu0 %v117
  %148 = vmatprep.subr.bf16.mxu0 0
  %149 = vmatpush1.bf16.msra.mxu0 %v140
  %150 = vmatprep.subr.bf16.mxu0 0
  %151 = vmatpush1.bf16.msra.mxu0 0
  %152 = vmatprep.subr.bf16.mxu0 0
  %153 = vmatpush1.bf16.msra.mxu0 0
  %154 = vmatprep.subr.bf16.mxu0 0
  %155 = vmatpush1.bf16.msra.mxu0 0
  %156 = vmatprep.subr.bf16.mxu0 0
  %157 = vmatpush1.bf16.msra.mxu0 0
  %158 = vmatprep.subr.bf16.mxu0 0
  %159 = vmatpush1.bf16.msra.mxu0 0
  %160 = vmatprep.subr.bf16.mxu0 0
  %161 = vmatpush1.bf16.msra.mxu0 0
  %162 = vmatprep.subr.bf16.mxu0 0
  %163 = vmatpush1.bf16.msra.mxu0 0
  %164 = vmatprep.subr.bf16.mxu0 0
  %165 = vmatpush1.bf16.msra.mxu0 0
  %166 = vmatprep.subr.bf16.mxu0 0
  %167 = vmatpush1.bf16.msra.mxu0 0
  %168 = vmatprep.subr.bf16.mxu0 0
  %169 = vmatpush1.bf16.msra.mxu0 0
  %170 = vmatprep.subr.bf16.mxu0 0
  %171 = vmatpush1.bf16.msra.mxu0 0
  %172 = vmatprep.subr.bf16.mxu0 0
  %173 = vmatpush1.bf16.msra.mxu0 0
  %174 = vmatprep.mubr.bf16.mxu0 0
  %175 = vmatmul.mubr.bf16.gmra.mrb[0].mxu0 %v124
  %v176 = vpop.f32.mrb[0].mxu0
  %v177 = vadd.f32 0.0, %v176
  %v178 = vpop.f32.mrb[0].mxu0
  %v179 = vpop.f32.mrb[0].mxu0
  %v180 = vadd.f32 0.0, %v179
  %v181 = vpop.f32.mrb[0].mxu0
  %182 = vmatprep.mubr.bf16.mxu0 0
  %183 = vmatmul.mubr.bf16.gmra.mrb[0].mxu0 %v127
  %v184 = vpop.f32.mrb[0].mxu0
  %v185 = vadd.f32 0.0, %v184
  %v186 = vpop.f32.mrb[0].mxu0
  %v187 = vpop.f32.mrb[0].mxu0
  %v188 = vadd.f32 0.0, %v187
  %v189 = vpop.f32.mrb[0].mxu0
  %190 = vmatprep.mubr.bf16.mxu0 0
  %191 = vmatmul.mubr.bf16.gmra.mrb[0].mxu0 %v130
  %v192 = vpop.f32.mrb[0].mxu0
  %v193 = vadd.f32 0.0, %v192
  %v194 = vpop.f32.mrb[0].mxu0
  %v195 = vpop.f32.mrb[0].mxu0
  %v196 = vadd.f32 0.0, %v195
  %v197 = vpop.f32.mrb[0].mxu0
  %198 = vmatprep.mubr.bf16.mxu0 0
  %199 = vmatmul.mubr.bf16.gmra.mrb[0].mxu0 %v133
  %v200 = vpop.f32.mrb[0].mxu0
  %v201 = vadd.f32 0.0, %v200
  %v202 = vpop.f32.mrb[0].mxu0
  %v203 = vpop.f32.mrb[0].mxu0
  %v204 = vadd.f32 0.0, %v203
  %v205 = vpop.f32.mrb[0].mxu0
  %206 = vmatprep.mubr.bf16.mxu0 0
  %207 = vmatmul.mubr.bf16.gmra.mrb[0].mxu0 %v136
  %v208 = vpop.f32.mrb[0].mxu0
  %v209 = vadd.f32 0.0, %v208
  %v210 = vpop.f32.mrb[0].mxu0
  %v211 = vpop.f32.mrb[0].mxu0
  %v212 = vadd.f32 0.0, %v211
  %v213 = vpop.f32.mrb[0].mxu0
  %214 = vdwg.mxu0
  %v215 = vpack.c.bf16 %v180, %v177
  %v216 = vpack.c.bf16 %v188, %v185
  %v217 = vpack.c.bf16 %v196, %v193
  %v218 = vpack.c.bf16 %v204, %v201
  %v219 = vpack.c.bf16 %v212, %v209
  %v220 = vld [vmem:[%s2] sm:$0xff]
  %v221 = vld [vmem:[%s2 + $0x8] sm:$0xff]
  %v222 = vld [vmem:[%s2 + $0x10] sm:$0xff]
  %v223 = vld [vmem:[%s2 + $0x18] sm:$0xff]
  %v224 = vld [vmem:[%s2 + $0x20] sm:$0xff]
  %v225 = vld [vmem:[%s2 + $0x28] sm:$0xff]
  %v226 = vld [vmem:[%s2 + $0x30] sm:$0xff]
  %v227 = vld [vmem:[%s2 + $0x38] sm:$0xff]
  %v228 = vld [vmem:[%s4] sm:$0xf]
  %v230 = vlaneseq
  %v231 = vshrl.u32 %v230, 7
  %v232 = vsub.s32 0, %v231
  %v233 = vrot.slane %v228, %v232
  %v234 = vlaneseq
  %v235 = vshrl.u32 %v234, 7
  %v236 = vsub.s32 1, %v235
  %v237 = vrot.slane %v228, %v236
  %v238 = vlaneseq
  %v239 = vshrl.u32 %v238, 7
  %v240 = vsub.s32 2, %v239
  %v241 = vrot.slane %v228, %v240
  %v242 = vlaneseq
  %v243 = vshrl.u32 %v242, 7
  %v244 = vsub.s32 3, %v243
  %v245 = vrot.slane %v228, %v244
  %v258 = vunpack.c.l.b16 %v220
  %v259 = vunpack.c.h.b16 %v220
  %v260 = vunpack.c.l.b16 %v221
  %v261 = vunpack.c.h.b16 %v221
  %v262 = vunpack.c.l.b16 %v222
  %v263 = vunpack.c.h.b16 %v222
  %v264 = vunpack.c.l.b16 %v223
  %v265 = vunpack.c.h.b16 %v223
  %v266 = vunpack.c.l.b16 %v224
  %v267 = vunpack.c.h.b16 %v224
  %v268 = vunpack.c.l.b16 %v225
  %v269 = vunpack.c.h.b16 %v225
  %v270 = vunpack.c.l.b16 %v226
  %v271 = vunpack.c.h.b16 %v226
  %v272 = vunpack.c.l.b16 %v227
  %v273 = vunpack.c.h.b16 %v227
  %v274 = vpack.c.b16 %v262, %v258
  %v275 = vpack.c.b16 %v263, %v259
  %v276 = vpack.c.b16 %v264, %v260
  %v277 = vpack.c.b16 %v265, %v261
  %v278 = vpack.c.b16 %v270, %v266
  %v279 = vpack.c.b16 %v271, %v267
  %v280 = vpack.c.b16 %v272, %v268
  %v281 = vpack.c.b16 %v273, %v269
  %vm290 = vcmask 261120
  %v292 = vsel %vm290, %v215, 0
  %v295 = vsel %vm290, %v216, 0
  %v298 = vsel %vm290, %v217, 0
  %v301 = vsel %vm290, %v218, 0
  %v304 = vsel %vm290, %v219, 0
  %306 = vmatprep.subr.bf16.mxu0 %v275
  %307 = vmatpush1.bf16.msra.mxu0 %v274
  %308 = vmatprep.subr.bf16.mxu0 %v279
  %309 = vmatpush1.bf16.msra.mxu0 %v278
  %310 = vmatprep.subr.bf16.mxu0 0
  %311 = vmatpush1.bf16.msra.mxu0 0
  %312 = vmatprep.subr.bf16.mxu0 0
  %313 = vmatpush1.bf16.msra.mxu0 0
  %314 = vmatprep.subr.bf16.mxu0 0
  %315 = vmatpush1.bf16.msra.mxu0 0
  %316 = vmatprep.subr.bf16.mxu0 0
  %317 = vmatpush1.bf16.msra.mxu0 0
  %318 = vmatprep.subr.bf16.mxu0 0
  %319 = vmatpush1.bf16.msra.mxu0 0
  %320 = vmatprep.subr.bf16.mxu0 0
  %321 = vmatpush1.bf16.msra.mxu0 0
  %322 = vmatprep.subr.bf16.mxu0 0
  %323 = vmatpush1.bf16.msra.mxu0 0
  %324 = vmatprep.subr.bf16.mxu0 0
  %325 = vmatpush1.bf16.msra.mxu0 0
  %326 = vmatprep.subr.bf16.mxu0 0
  %327 = vmatpush1.bf16.msra.mxu0 0
  %328 = vmatprep.subr.bf16.mxu0 0
  %329 = vmatpush1.bf16.msra.mxu0 0
  %330 = vmatprep.subr.bf16.mxu0 0
  %331 = vmatpush1.bf16.msra.mxu0 0
  %332 = vmatprep.subr.bf16.mxu0 0
  %333 = vmatpush1.bf16.msra.mxu0 0
  %334 = vmatprep.subr.bf16.mxu0 0
  %335 = vmatpush1.bf16.msra.mxu0 0
  %336 = vmatprep.subr.bf16.mxu0 0
  %337 = vmatpush1.bf16.msra.mxu0 0
  %338 = vmatprep.mubr.bf16.mxu0 0
  %339 = vmatmul.mubr.bf16.gmra.mrb[0].mxu0 %v292
  %v340 = vpop.f32.mrb[0].mxu0
  %v341 = vadd.f32 %v233, %v340
  %v342 = vpop.f32.mrb[0].mxu0
  %v343 = vadd.f32 %v237, %v342
  %v344 = vpop.f32.mrb[0].mxu0
  %v345 = vadd.f32 %v233, %v344
  %v346 = vpop.f32.mrb[0].mxu0
  %v347 = vadd.f32 %v237, %v346
  %348 = vmatprep.mubr.bf16.mxu0 0
  %349 = vmatmul.mubr.bf16.gmra.mrb[0].mxu0 %v295
  %v350 = vpop.f32.mrb[0].mxu0
  %v351 = vadd.f32 %v233, %v350
  %v352 = vpop.f32.mrb[0].mxu0
  %v353 = vadd.f32 %v237, %v352
  %v354 = vpop.f32.mrb[0].mxu0
  %v355 = vadd.f32 %v233, %v354
  %v356 = vpop.f32.mrb[0].mxu0
  %v357 = vadd.f32 %v237, %v356
  %358 = vmatprep.mubr.bf16.mxu0 0
  %359 = vmatmul.mubr.bf16.gmra.mrb[0].mxu0 %v298
  %v360 = vpop.f32.mrb[0].mxu0
  %v361 = vadd.f32 %v233, %v360
  %v362 = vpop.f32.mrb[0].mxu0
  %v363 = vadd.f32 %v237, %v362
  %v364 = vpop.f32.mrb[0].mxu0
  %v365 = vadd.f32 %v233, %v364
  %v366 = vpop.f32.mrb[0].mxu0
  %v367 = vadd.f32 %v237, %v366
  %368 = vmatprep.mubr.bf16.mxu0 0
  %369 = vmatmul.mubr.bf16.gmra.mrb[0].mxu0 %v301
  %v370 = vpop.f32.mrb[0].mxu0
  %v371 = vadd.f32 %v233, %v370
  %v372 = vpop.f32.mrb[0].mxu0
  %v373 = vadd.f32 %v237, %v372
  %v374 = vpop.f32.mrb[0].mxu0
  %v375 = vadd.f32 %v233, %v374
  %v376 = vpop.f32.mrb[0].mxu0
  %v377 = vadd.f32 %v237, %v376
  %378 = vmatprep.mubr.bf16.mxu0 0
  %379 = vmatmul.mubr.bf16.gmra.mrb[0].mxu0 %v304
  %v380 = vpop.f32.mrb[0].mxu0
  %v381 = vadd.f32 %v233, %v380
  %v382 = vpop.f32.mrb[0].mxu0
  %v383 = vadd.f32 %v237, %v382
  %v384 = vpop.f32.mrb[0].mxu0
  %v385 = vadd.f32 %v233, %v384
  %v386 = vpop.f32.mrb[0].mxu0
  %v387 = vadd.f32 %v237, %v386
  %388 = vdwg.mxu0
  %389 = vmatprep.subr.bf16.mxu0 %v277
  %390 = vmatpush1.bf16.msra.mxu0 %v276
  %391 = vmatprep.subr.bf16.mxu0 %v281
  %392 = vmatpush1.bf16.msra.mxu0 %v280
  %393 = vmatprep.subr.bf16.mxu0 0
  %394 = vmatpush1.bf16.msra.mxu0 0
  %395 = vmatprep.subr.bf16.mxu0 0
  %396 = vmatpush1.bf16.msra.mxu0 0
  %397 = vmatprep.subr.bf16.mxu0 0
  %398 = vmatpush1.bf16.msra.mxu0 0
  %399 = vmatprep.subr.bf16.mxu0 0
  %400 = vmatpush1.bf16.msra.mxu0 0
  %401 = vmatprep.subr.bf16.mxu0 0
  %402 = vmatpush1.bf16.msra.mxu0 0
  %403 = vmatprep.subr.bf16.mxu0 0
  %404 = vmatpush1.bf16.msra.mxu0 0
  %405 = vmatprep.subr.bf16.mxu0 0
  %406 = vmatpush1.bf16.msra.mxu0 0
  %407 = vmatprep.subr.bf16.mxu0 0
  %408 = vmatpush1.bf16.msra.mxu0 0
  %409 = vmatprep.subr.bf16.mxu0 0
  %410 = vmatpush1.bf16.msra.mxu0 0
  %411 = vmatprep.subr.bf16.mxu0 0
  %412 = vmatpush1.bf16.msra.mxu0 0
  %413 = vmatprep.subr.bf16.mxu0 0
  %414 = vmatpush1.bf16.msra.mxu0 0
  %415 = vmatprep.subr.bf16.mxu0 0
  %416 = vmatpush1.bf16.msra.mxu0 0
  %417 = vmatprep.subr.bf16.mxu0 0
  %418 = vmatpush1.bf16.msra.mxu0 0
  %419 = vmatprep.subr.bf16.mxu0 0
  %420 = vmatpush1.bf16.msra.mxu0 0
  %421 = vmatprep.mubr.bf16.mxu0 0
  %422 = vmatmul.mubr.bf16.gmra.mrb[0].mxu0 %v292
  %v423 = vpop.f32.mrb[0].mxu0
  %v424 = vadd.f32 %v241, %v423
  %v425 = vpop.f32.mrb[0].mxu0
  %v426 = vadd.f32 %v245, %v425
  %v427 = vpop.f32.mrb[0].mxu0
  %v428 = vadd.f32 %v241, %v427
  %v429 = vpop.f32.mrb[0].mxu0
  %v430 = vadd.f32 %v245, %v429
  %431 = vmatprep.mubr.bf16.mxu0 0
  %432 = vmatmul.mubr.bf16.gmra.mrb[0].mxu0 %v295
  %v433 = vpop.f32.mrb[0].mxu0
  %v434 = vadd.f32 %v241, %v433
  %v435 = vpop.f32.mrb[0].mxu0
  %v436 = vadd.f32 %v245, %v435
  %v437 = vpop.f32.mrb[0].mxu0
  %v438 = vadd.f32 %v241, %v437
  %v439 = vpop.f32.mrb[0].mxu0
  %v440 = vadd.f32 %v245, %v439
  %441 = vmatprep.mubr.bf16.mxu0 0
  %442 = vmatmul.mubr.bf16.gmra.mrb[0].mxu0 %v298
  %v443 = vpop.f32.mrb[0].mxu0
  %v444 = vadd.f32 %v241, %v443
  %v445 = vpop.f32.mrb[0].mxu0
  %v446 = vadd.f32 %v245, %v445
  %v447 = vpop.f32.mrb[0].mxu0
  %v448 = vadd.f32 %v241, %v447
  %v449 = vpop.f32.mrb[0].mxu0
  %v450 = vadd.f32 %v245, %v449
  %451 = vmatprep.mubr.bf16.mxu0 0
  %452 = vmatmul.mubr.bf16.gmra.mrb[0].mxu0 %v301
  %v453 = vpop.f32.mrb[0].mxu0
  %v454 = vadd.f32 %v241, %v453
  %v455 = vpop.f32.mrb[0].mxu0
  %v456 = vadd.f32 %v245, %v455
  %v457 = vpop.f32.mrb[0].mxu0
  %v458 = vadd.f32 %v241, %v457
  %v459 = vpop.f32.mrb[0].mxu0
  %v460 = vadd.f32 %v245, %v459
  %461 = vmatprep.mubr.bf16.mxu0 0
  %462 = vmatmul.mubr.bf16.gmra.mrb[0].mxu0 %v304
  %v463 = vpop.f32.mrb[0].mxu0
  %v464 = vadd.f32 %v241, %v463
  %v465 = vpop.f32.mrb[0].mxu0
  %v466 = vadd.f32 %v245, %v465
  %v467 = vpop.f32.mrb[0].mxu0
  %v468 = vadd.f32 %v241, %v467
  %v469 = vpop.f32.mrb[0].mxu0
  %v470 = vadd.f32 %v245, %v469
  %471 = vdwg.mxu0
  %472 = vst [vmem:[#allocation2] sm:$0xff] %v341
  %473 = vst [vmem:[#allocation2 + $0x8] sm:$0xff] %v343
  %474 = vst [vmem:[#allocation2 + $0x10] sm:$0xff] %v424
  %475 = vst [vmem:[#allocation2 + $0x18] sm:$0xff] %v426
  %476 = vst [vmem:[#allocation2 + $0x20] sm:$0xff] %v345
  %477 = vst [vmem:[#allocation2 + $0x28] sm:$0xff] %v347
  %478 = vst [vmem:[#allocation2 + $0x30] sm:$0xff] %v428
  %479 = vst [vmem:[#allocation2 + $0x38] sm:$0xff] %v430
  %480 = vst [vmem:[#allocation2 + $0x40] sm:$0xff] %v351
  %481 = vst [vmem:[#allocation2 + $0x48] sm:$0xff] %v353
  %482 = vst [vmem:[#allocation2 + $0x50] sm:$0xff] %v434
  %483 = vst [vmem:[#allocation2 + $0x58] sm:$0xff] %v436
  %484 = vst [vmem:[#allocation2 + $0x60] sm:$0xff] %v355
  %485 = vst [vmem:[#allocation2 + $0x68] sm:$0xff] %v357
  %486 = vst [vmem:[#allocation2 + $0x70] sm:$0xff] %v438
  %487 = vst [vmem:[#allocation2 + $0x78] sm:$0xff] %v440
  %488 = vst [vmem:[#allocation2 + $0x80] sm:$0xff] %v361
  %489 = vst [vmem:[#allocation2 + $0x88] sm:$0xff] %v363
  %490 = vst [vmem:[#allocation2 + $0x90] sm:$0xff] %v444
  %491 = vst [vmem:[#allocation2 + $0x98] sm:$0xff] %v446
  %492 = vst [vmem:[#allocation2 + $0xa0] sm:$0xff] %v365
  %493 = vst [vmem:[#allocation2 + $0xa8] sm:$0xff] %v367
  %494 = vst [vmem:[#allocation2 + $0xb0] sm:$0xff] %v448
  %495 = vst [vmem:[#allocation2 + $0xb8] sm:$0xff] %v450
  %496 = vst [vmem:[#allocation2 + $0xc0] sm:$0xff] %v371
  %497 = vst [vmem:[#allocation2 + $0xc8] sm:$0xff] %v373
  %498 = vst [vmem:[#allocation2 + $0xd0] sm:$0xff] %v454
  %499 = vst [vmem:[#allocation2 + $0xd8] sm:$0xff] %v456
  %500 = vst [vmem:[#allocation2 + $0xe0] sm:$0xff] %v375
  %501 = vst [vmem:[#allocation2 + $0xe8] sm:$0xff] %v377
  %502 = vst [vmem:[#allocation2 + $0xf0] sm:$0xff] %v458
  %503 = vst [vmem:[#allocation2 + $0xf8] sm:$0xff] %v460
  %504 = vst [vmem:[#allocation2 + $0x100] sm:$0xff] %v381
  %505 = vst [vmem:[#allocation2 + $0x108] sm:$0xff] %v383
  %506 = vst [vmem:[#allocation2 + $0x110] sm:$0xff] %v464
  %507 = vst [vmem:[#allocation2 + $0x118] sm:$0xff] %v466
  %508 = vst [vmem:[#allocation2 + $0x120] sm:$0xff] %v385
  %509 = vst [vmem:[#allocation2 + $0x128] sm:$0xff] %v387
  %510 = vst [vmem:[#allocation2 + $0x130] sm:$0xff] %v468
  %511 = vst [vmem:[#allocation2 + $0x138] sm:$0xff] %v470
  %v512 = vld [vmem:[%s3] sm:$0xff]
  %v513 = vld [vmem:[%s3 + $0x8] sm:$0xff]
  %v514 = vld [vmem:[%s3 + $0x10] sm:$0xff]
  %v515 = vld [vmem:[%s3 + $0x18] sm:$0xff]
  %v516 = vld [vmem:[%s3 + $0x20] sm:$0xff]
  %v517 = vld [vmem:[%s3 + $0x28] sm:$0xff]
  %v518 = vld [vmem:[%s3 + $0x30] sm:$0xff]
  %v519 = vld [vmem:[%s3 + $0x38] sm:$0xff]
  %v520 = vld [vmem:[%s3 + $0x40] sm:$0xff]
  %v521 = vld [vmem:[%s3 + $0x48] sm:$0xff]
  %v522 = vld [vmem:[%s3 + $0x50] sm:$0xff]
  %v523 = vld [vmem:[%s3 + $0x58] sm:$0xff]
  %v524 = vld [vmem:[%s3 + $0x60] sm:$0xff]
  %v525 = vld [vmem:[%s3 + $0x68] sm:$0xff]
  %v526 = vld [vmem:[%s3 + $0x70] sm:$0xff]
  %v527 = vld [vmem:[%s3 + $0x78] sm:$0xff]
  %v528 = vld [vmem:[%s3 + $0x80] sm:$0xff]
  %v529 = vld [vmem:[%s3 + $0x88] sm:$0xff]
  %v530 = vld [vmem:[%s3 + $0x90] sm:$0xff]
  %v531 = vld [vmem:[%s3 + $0x98] sm:$0xff]
  %v532 = vld [vmem:[%s3 + $0xa0] sm:$0xff]
  %v533 = vld [vmem:[%s3 + $0xa8] sm:$0xff]
  %v534 = vld [vmem:[%s3 + $0xb0] sm:$0xff]
  %v535 = vld [vmem:[%s3 + $0xb8] sm:$0xff]
  %v536 = vld [vmem:[%s3 + $0xc0] sm:$0xff]
  %v537 = vld [vmem:[%s3 + $0xc8] sm:$0xff]
  %v538 = vld [vmem:[%s3 + $0xd0] sm:$0xff]
  %v539 = vld [vmem:[%s3 + $0xd8] sm:$0xff]
  %v540 = vld [vmem:[%s3 + $0xe0] sm:$0xff]
  %v541 = vld [vmem:[%s3 + $0xe8] sm:$0xff]
  %v542 = vld [vmem:[%s3 + $0xf0] sm:$0xff]
  %v543 = vld [vmem:[%s3 + $0xf8] sm:$0xff]
  %s544 = smul.u32 0, 4
  %s545 = smul.addr %s544, 8
  %s546 = scalar_lea.vmem [#allocation2], %s545
  %v547 = vld [vmem:[%s546] sm:$0xff]
  %v548 = vld [vmem:[%s546 + $0x8] sm:$0xff]
  %v549 = vld [vmem:[%s546 + $0x10] sm:$0xff]
  %v550 = vld [vmem:[%s546 + $0x18] sm:$0xff]
  %v583 = vunpack.c.l.b16 %v512
  %v584 = vunpack.c.h.b16 %v512
  %v585 = vunpack.c.l.b16 %v513
  %v586 = vunpack.c.h.b16 %v513
  %v587 = vunpack.c.l.b16 %v514
  %v588 = vunpack.c.h.b16 %v514
  %v589 = vunpack.c.l.b16 %v515
  %v590 = vunpack.c.h.b16 %v515
  %v591 = vunpack.c.l.b16 %v516
  %v592 = vunpack.c.h.b16 %v516
  %v593 = vunpack.c.l.b16 %v517
  %v594 = vunpack.c.h.b16 %v517
  %v595 = vunpack.c.l.b16 %v518
  %v596 = vunpack.c.h.b16 %v518
  %v597 = vunpack.c.l.b16 %v519
  %v598 = vunpack.c.h.b16 %v519
  %v599 = vunpack.c.l.b16 %v520
  %v600 = vunpack.c.h.b16 %v520
  %v601 = vunpack.c.l.b16 %v521
  %v602 = vunpack.c.h.b16 %v521
  %v603 = vunpack.c.l.b16 %v522
  %v604 = vunpack.c.h.b16 %v522
  %v605 = vunpack.c.l.b16 %v523
  %v606 = vunpack.c.h.b16 %v523
  %v607 = vunpack.c.l.b16 %v524
  %v608 = vunpack.c.h.b16 %v524
  %v609 = vunpack.c.l.b16 %v525
  %v610 = vunpack.c.h.b16 %v525
  %v611 = vunpack.c.l.b16 %v526
  %v612 = vunpack.c.h.b16 %v526
  %v613 = vunpack.c.l.b16 %v527
  %v614 = vunpack.c.h.b16 %v527
  %v615 = vunpack.c.l.b16 %v528
  %v616 = vunpack.c.h.b16 %v528
  %v617 = vunpack.c.l.b16 %v529
  %v618 = vunpack.c.h.b16 %v529
  %v619 = vunpack.c.l.b16 %v530
  %v620 = vunpack.c.h.b16 %v530
  %v621 = vunpack.c.l.b16 %v531
  %v622 = vunpack.c.h.b16 %v531
  %v623 = vunpack.c.l.b16 %v532
  %v624 = vunpack.c.h.b16 %v532
  %v625 = vunpack.c.l.b16 %v533
  %v626 = vunpack.c.h.b16 %v533
  %v627 = vunpack.c.l.b16 %v534
  %v628 = vunpack.c.h.b16 %v534
  %v629 = vunpack.c.l.b16 %v535
  %v630 = vunpack.c.h.b16 %v535
  %v631 = vunpack.c.l.b16 %v536
  %v632 = vunpack.c.h.b16 %v536
  %v633 = vunpack.c.l.b16 %v537
  %v634 = vunpack.c.h.b16 %v537
  %v635 = vunpack.c.l.b16 %v538
  %v636 = vunpack.c.h.b16 %v538
  %v637 = vunpack.c.l.b16 %v539
  %v638 = vunpack.c.h.b16 %v539
  %v639 = vunpack.c.l.b16 %v540
  %v640 = vunpack.c.h.b16 %v540
  %v641 = vunpack.c.l.b16 %v541
  %v642 = vunpack.c.h.b16 %v541
  %v643 = vunpack.c.l.b16 %v542
  %v644 = vunpack.c.h.b16 %v542
  %v645 = vunpack.c.l.b16 %v543
  %v646 = vunpack.c.h.b16 %v543
  %v647 = vpack.c.b16 %v587, %v583
  %v648 = vpack.c.b16 %v588, %v584
  %v649 = vpack.c.b16 %v589, %v585
  %v650 = vpack.c.b16 %v590, %v586
  %v651 = vpack.c.b16 %v595, %v591
  %v652 = vpack.c.b16 %v596, %v592
  %v653 = vpack.c.b16 %v597, %v593
  %v654 = vpack.c.b16 %v598, %v594
  %v655 = vpack.c.b16 %v603, %v599
  %v656 = vpack.c.b16 %v604, %v600
  %v657 = vpack.c.b16 %v605, %v601
  %v658 = vpack.c.b16 %v606, %v602
  %v659 = vpack.c.b16 %v611, %v607
  %v660 = vpack.c.b16 %v612, %v608
  %v661 = vpack.c.b16 %v613, %v609
  %v662 = vpack.c.b16 %v614, %v610
  %v663 = vpack.c.b16 %v619, %v615
  %v664 = vpack.c.b16 %v620, %v616
  %v665 = vpack.c.b16 %v621, %v617
  %v666 = vpack.c.b16 %v622, %v618
  %v667 = vpack.c.b16 %v627, %v623
  %v668 = vpack.c.b16 %v628, %v624
  %v669 = vpack.c.b16 %v629, %v625
  %v670 = vpack.c.b16 %v630, %v626
  %v671 = vpack.c.b16 %v635, %v631
  %v672 = vpack.c.b16 %v636, %v632
  %v673 = vpack.c.b16 %v637, %v633
  %v674 = vpack.c.b16 %v638, %v634
  %v675 = vpack.c.b16 %v643, %v639
  %v676 = vpack.c.b16 %v644, %v640
  %v677 = vpack.c.b16 %v645, %v641
  %v678 = vpack.c.b16 %v646, %v642
  %711 = vmatprep.subr.bf16.mxu0 %v648
  %712 = vmatpush1.bf16.msra.mxu0 %v647
  %713 = vmatprep.subr.bf16.mxu0 %v652
  %714 = vmatpush1.bf16.msra.mxu0 %v651
  %715 = vmatprep.subr.bf16.mxu0 %v656
  %716 = vmatpush1.bf16.msra.mxu0 %v655
  %717 = vmatprep.subr.bf16.mxu0 %v660
  %718 = vmatpush1.bf16.msra.mxu0 %v659
  %719 = vmatprep.subr.bf16.mxu0 %v664
  %720 = vmatpush1.bf16.msra.mxu0 %v663
  %721 = vmatprep.subr.bf16.mxu0 %v668
  %722 = vmatpush1.bf16.msra.mxu0 %v667
  %723 = vmatprep.subr.bf16.mxu0 %v672
  %724 = vmatpush1.bf16.msra.mxu0 %v671
  %725 = vmatprep.subr.bf16.mxu0 %v676
  %726 = vmatpush1.bf16.msra.mxu0 %v675
  %727 = vmatprep.subr.bf16.mxu0 0
  %728 = vmatpush1.bf16.msra.mxu0 0
  %729 = vmatprep.subr.bf16.mxu0 0
  %730 = vmatpush1.bf16.msra.mxu0 0
  %731 = vmatprep.subr.bf16.mxu0 0
  %732 = vmatpush1.bf16.msra.mxu0 0
  %733 = vmatprep.subr.bf16.mxu0 0
  %734 = vmatpush1.bf16.msra.mxu0 0
  %735 = vmatprep.subr.bf16.mxu0 0
  %736 = vmatpush1.bf16.msra.mxu0 0
  %737 = vmatprep.subr.bf16.mxu0 0
  %738 = vmatpush1.bf16.msra.mxu0 0
  %739 = vmatprep.subr.bf16.mxu0 0
  %740 = vmatpush1.bf16.msra.mxu0 0
  %741 = vmatprep.subr.bf16.mxu0 0
  %742 = vmatpush1.bf16.msra.mxu0 0
  %743 = vmatprep.mubr.bf16.mxu0 0
  %744 = vmatmul.mubr.bf16.gmra.mrb[0].mxu0 0
  %v745 = vpop.f32.mrb[0].mxu0
  %v746 = vadd.f32 0.0, %v745
  %v747 = vpop.f32.mrb[0].mxu0
  %v748 = vadd.f32 0.0, %v747
  %v749 = vpop.f32.mrb[0].mxu0
  %v750 = vpop.f32.mrb[0].mxu0
  %751 = vdwg.mxu0
  %752 = vmatprep.subr.bf16.mxu0 %v650
  %753 = vmatpush1.bf16.msra.mxu0 %v649
  %754 = vmatprep.subr.bf16.mxu0 %v654
  %755 = vmatpush1.bf16.msra.mxu0 %v653
  %756 = vmatprep.subr.bf16.mxu0 %v658
  %757 = vmatpush1.bf16.msra.mxu0 %v657
  %758 = vmatprep.subr.bf16.mxu0 %v662
  %759 = vmatpush1.bf16.msra.mxu0 %v661
  %760 = vmatprep.subr.bf16.mxu0 %v666
  %761 = vmatpush1.bf16.msra.mxu0 %v665
  %762 = vmatprep.subr.bf16.mxu0 %v670
  %763 = vmatpush1.bf16.msra.mxu0 %v669
  %764 = vmatprep.subr.bf16.mxu0 %v674
  %765 = vmatpush1.bf16.msra.mxu0 %v673
  %766 = vmatprep.subr.bf16.mxu0 %v678
  %767 = vmatpush1.bf16.msra.mxu0 %v677
  %768 = vmatprep.subr.bf16.mxu0 0
  %769 = vmatpush1.bf16.msra.mxu0 0
  %770 = vmatprep.subr.bf16.mxu0 0
  %771 = vmatpush1.bf16.msra.mxu0 0
  %772 = vmatprep.subr.bf16.mxu0 0
  %773 = vmatpush1.bf16.msra.mxu0 0
  %774 = vmatprep.subr.bf16.mxu0 0
  %775 = vmatpush1.bf16.msra.mxu0 0
  %776 = vmatprep.subr.bf16.mxu0 0
  %777 = vmatpush1.bf16.msra.mxu0 0
  %778 = vmatprep.subr.bf16.mxu0 0
  %779 = vmatpush1.bf16.msra.mxu0 0
  %780 = vmatprep.subr.bf16.mxu0 0
  %781 = vmatpush1.bf16.msra.mxu0 0
  %782 = vmatprep.subr.bf16.mxu0 0
  %783 = vmatpush1.bf16.msra.mxu0 0
  %784 = vmatprep.mubr.bf16.mxu0 0
  %785 = vmatmul.mubr.bf16.gmra.mrb[0].mxu0 0
  %v786 = vpop.f32.mrb[0].mxu0
  %v787 = vadd.f32 0.0, %v786
  %v788 = vpop.f32.mrb[0].mxu0
  %v789 = vadd.f32 0.0, %v788
  %v790 = vpop.f32.mrb[0].mxu0
  %v791 = vpop.f32.mrb[0].mxu0
  %792 = vdwg.mxu0
  %v793 = vadd.f32 %v547, %v746
  %v794 = vadd.f32 %v548, %v748
  %v795 = vadd.f32 %v549, %v787
  %v796 = vadd.f32 %v550, %v789
  %v797 = vxor.u32 %v793, 2147483648
  %v798 = vmul.f32 %v797, 1.442695
  %v799 = vpow.pop %v798
  %v800 = vadd.f32 %v799, 1.0
  %v801 = vrcp.pop %v800
  %v802 = vmul.f32 1.0, %v801
  %v803 = vxor.u32 %v794, 2147483648
  %v804 = vmul.f32 %v803, 1.442695
  %v805 = vpow.pop %v804
  %v806 = vadd.f32 %v805, 1.0
  %v807 = vrcp.pop %v806
  %v808 = vmul.f32 1.0, %v807
  %v809 = vtanh.pop %v795
  %v810 = vxor.u32 %v796, 2147483648
  %v811 = vmul.f32 %v810, 1.442695
  %v812 = vpow.pop %v811
  %v813 = vadd.f32 %v812, 1.0
  %v814 = vrcp.pop %v813
  %v815 = vmul.f32 1.0, %v814
  %v816 = vmul.f32 %v808, 0.0
  %v817 = vmul.f32 %v802, %v809
  %v818 = vadd.f32 %v816, %v817
  %v819 = vtanh.pop %v818
  %v820 = vmul.f32 %v815, %v819
  %s821 = smul.u32 1, 4
  %s822 = smul.addr %s821, 8
  %s823 = scalar_lea.vmem [#allocation2], %s822
  %v824 = vld [vmem:[%s823] sm:$0xff]
  %v825 = vld [vmem:[%s823 + $0x8] sm:$0xff]
  %v826 = vld [vmem:[%s823 + $0x10] sm:$0xff]
  %v827 = vld [vmem:[%s823 + $0x18] sm:$0xff]
  %v828 = vpack.c.bf16 %v820, %v820
  %829 = vmatprep.subr.bf16.mxu0 %v648
  %830 = vmatpush1.bf16.msra.mxu0 %v647
  %831 = vmatprep.subr.bf16.mxu0 %v652
  %832 = vmatpush1.bf16.msra.mxu0 %v651
  %833 = vmatprep.subr.bf16.mxu0 %v656
  %834 = vmatpush1.bf16.msra.mxu0 %v655
  %835 = vmatprep.subr.bf16.mxu0 %v660
  %836 = vmatpush1.bf16.msra.mxu0 %v659
  %837 = vmatprep.subr.bf16.mxu0 %v664
  %838 = vmatpush1.bf16.msra.mxu0 %v663
  %839 = vmatprep.subr.bf16.mxu0 %v668
  %840 = vmatpush1.bf16.msra.mxu0 %v667
  %841 = vmatprep.subr.bf16.mxu0 %v672
  %842 = vmatpush1.bf16.msra.mxu0 %v671
  %843 = vmatprep.subr.bf16.mxu0 %v676
  %844 = vmatpush1.bf16.msra.mxu0 %v675
  %845 = vmatprep.subr.bf16.mxu0 0
  %846 = vmatpush1.bf16.msra.mxu0 0
  %847 = vmatprep.subr.bf16.mxu0 0
  %848 = vmatpush1.bf16.msra.mxu0 0
  %849 = vmatprep.subr.bf16.mxu0 0
  %850 = vmatpush1.bf16.msra.mxu0 0
  %851 = vmatprep.subr.bf16.mxu0 0
  %852 = vmatpush1.bf16.msra.mxu0 0
  %853 = vmatprep.subr.bf16.mxu0 0
  %854 = vmatpush1.bf16.msra.mxu0 0
  %855 = vmatprep.subr.bf16.mxu0 0
  %856 = vmatpush1.bf16.msra.mxu0 0
  %857 = vmatprep.subr.bf16.mxu0 0
  %858 = vmatpush1.bf16.msra.mxu0 0
  %859 = vmatprep.subr.bf16.mxu0 0
  %860 = vmatpush1.bf16.msra.mxu0 0
  %861 = vmatprep.mubr.bf16.mxu0 0
  %862 = vmatmul.mubr.bf16.gmra.mrb[0].mxu0 %v828
  %v863 = vpop.f32.mrb[0].mxu0
  %v864 = vadd.f32 0.0, %v863
  %v865 = vpop.f32.mrb[0].mxu0
  %v866 = vadd.f32 0.0, %v865
  %v867 = vpop.f32.mrb[0].mxu0
  %v868 = vpop.f32.mrb[0].mxu0
  %869 = vdwg.mxu0
  %870 = vmatprep.subr.bf16.mxu0 %v650
  %871 = vmatpush1.bf16.msra.mxu0 %v649
  %872 = vmatprep.subr.bf16.mxu0 %v654
  %873 = vmatpush1.bf16.msra.mxu0 %v653
  %874 = vmatprep.subr.bf16.mxu0 %v658
  %875 = vmatpush1.bf16.msra.mxu0 %v657
  %876 = vmatprep.subr.bf16.mxu0 %v662
  %877 = vmatpush1.bf16.msra.mxu0 %v661
  %878 = vmatprep.subr.bf16.mxu0 %v666
  %879 = vmatpush1.bf16.msra.mxu0 %v665
  %880 = vmatprep.subr.bf16.mxu0 %v670
  %881 = vmatpush1.bf16.msra.mxu0 %v669
  %882 = vmatprep.subr.bf16.mxu0 %v674
  %883 = vmatpush1.bf16.msra.mxu0 %v673
  %884 = vmatprep.subr.bf16.mxu0 %v678
  %885 = vmatpush1.bf16.msra.mxu0 %v677
  %886 = vmatprep.subr.bf16.mxu0 0
  %887 = vmatpush1.bf16.msra.mxu0 0
  %888 = vmatprep.subr.bf16.mxu0 0
  %889 = vmatpush1.bf16.msra.mxu0 0
  %890 = vmatprep.subr.bf16.mxu0 0
  %891 = vmatpush1.bf16.msra.mxu0 0
  %892 = vmatprep.subr.bf16.mxu0 0
  %893 = vmatpush1.bf16.msra.mxu0 0
  %894 = vmatprep.subr.bf16.mxu0 0
  %895 = vmatpush1.bf16.msra.mxu0 0
  %896 = vmatprep.subr.bf16.mxu0 0
  %897 = vmatpush1.bf16.msra.mxu0 0
  %898 = vmatprep.subr.bf16.mxu0 0
  %899 = vmatpush1.bf16.msra.mxu0 0
  %900 = vmatprep.subr.bf16.mxu0 0
  %901 = vmatpush1.bf16.msra.mxu0 0
  %902 = vmatprep.mubr.bf16.mxu0 0
  %903 = vmatmul.mubr.bf16.gmra.mrb[0].mxu0 %v828
  %v904 = vpop.f32.mrb[0].mxu0
  %v905 = vadd.f32 0.0, %v904
  %v906 = vpop.f32.mrb[0].mxu0
  %v907 = vadd.f32 0.0, %v906
  %v908 = vpop.f32.mrb[0].mxu0
  %v909 = vpop.f32.mrb[0].mxu0
  %910 = vdwg.mxu0
  %v911 = vadd.f32 %v824, %v864
  %v912 = vadd.f32 %v825, %v866
  %v913 = vadd.f32 %v826, %v905
  %v914 = vadd.f32 %v827, %v907
  %v915 = vxor.u32 %v911, 2147483648
  %v916 = vmul.f32 %v915, 1.442695
  %v917 = vpow.pop %v916
  %v918 = vadd.f32 %v917, 1.0
  %v919 = vrcp.pop %v918
  %v920 = vmul.f32 1.0, %v919
  %v921 = vxor.u32 %v912, 2147483648
  %v922 = vmul.f32 %v921, 1.442695
  %v923 = vpow.pop %v922
  %v924 = vadd.f32 %v923, 1.0
  %v925 = vrcp.pop %v924
  %v926 = vmul.f32 1.0, %v925
  %v927 = vtanh.pop %v913
  %v928 = vxor.u32 %v914, 2147483648
  %v929 = vmul.f32 %v928, 1.442695
  %v930 = vpow.pop %v929
  %v931 = vadd.f32 %v930, 1.0
  %v932 = vrcp.pop %v931
  %v933 = vmul.f32 1.0, %v932
  %v934 = vmul.f32 %v926, %v818
  %v935 = vmul.f32 %v920, %v927
  %v936 = vadd.f32 %v934, %v935
  %v937 = vtanh.pop %v936
  %v938 = vmul.f32 %v933, %v937
  %s939 = smul.u32 2, 4
  %s940 = smul.addr %s939, 8
  %s941 = scalar_lea.vmem [#allocation2], %s940
  %v942 = vld [vmem:[%s941] sm:$0xff]
  %v943 = vld [vmem:[%s941 + $0x8] sm:$0xff]
  %v944 = vld [vmem:[%s941 + $0x10] sm:$0xff]
  %v945 = vld [vmem:[%s941 + $0x18] sm:$0xff]
  %v946 = vpack.c.bf16 %v938, %v938
  %947 = vmatprep.subr.bf16.mxu0 %v648
  %948 = vmatpush1.bf16.msra.mxu0 %v647
  %949 = vmatprep.subr.bf16.mxu0 %v652
  %950 = vmatpush1.bf16.msra.mxu0 %v651
  %951 = vmatprep.subr.bf16.mxu0 %v656
  %952 = vmatpush1.bf16.msra.mxu0 %v655
  %953 = vmatprep.subr.bf16.mxu0 %v660
  %954 = vmatpush1.bf16.msra.mxu0 %v659
  %955 = vmatprep.subr.bf16.mxu0 %v664
  %956 = vmatpush1.bf16.msra.mxu0 %v663
  %957 = vmatprep.subr.bf16.mxu0 %v668
  %958 = vmatpush1.bf16.msra.mxu0 %v667
  %959 = vmatprep.subr.bf16.mxu0 %v672
  %960 = vmatpush1.bf16.msra.mxu0 %v671
  %961 = vmatprep.subr.bf16.mxu0 %v676
  %962 = vmatpush1.bf16.msra.mxu0 %v675
  %963 = vmatprep.subr.bf16.mxu0 0
  %964 = vmatpush1.bf16.msra.mxu0 0
  %965 = vmatprep.subr.bf16.mxu0 0
  %966 = vmatpush1.bf16.msra.mxu0 0
  %967 = vmatprep.subr.bf16.mxu0 0
  %968 = vmatpush1.bf16.msra.mxu0 0
  %969 = vmatprep.subr.bf16.mxu0 0
  %970 = vmatpush1.bf16.msra.mxu0 0
  %971 = vmatprep.subr.bf16.mxu0 0
  %972 = vmatpush1.bf16.msra.mxu0 0
  %973 = vmatprep.subr.bf16.mxu0 0
  %974 = vmatpush1.bf16.msra.mxu0 0
  %975 = vmatprep.subr.bf16.mxu0 0
  %976 = vmatpush1.bf16.msra.mxu0 0
  %977 = vmatprep.subr.bf16.mxu0 0
  %978 = vmatpush1.bf16.msra.mxu0 0
  %979 = vmatprep.mubr.bf16.mxu0 0
  %980 = vmatmul.mubr.bf16.gmra.mrb[0].mxu0 %v946
  %v981 = vpop.f32.mrb[0].mxu0
  %v982 = vadd.f32 0.0, %v981
  %v983 = vpop.f32.mrb[0].mxu0
  %v984 = vadd.f32 0.0, %v983
  %v985 = vpop.f32.mrb[0].mxu0
  %v986 = vpop.f32.mrb[0].mxu0
  %987 = vdwg.mxu0
  %988 = vmatprep.subr.bf16.mxu0 %v650
  %989 = vmatpush1.bf16.msra.mxu0 %v649
  %990 = vmatprep.subr.bf16.mxu0 %v654
  %991 = vmatpush1.bf16.msra.mxu0 %v653
  %992 = vmatprep.subr.bf16.mxu0 %v658
  %993 = vmatpush1.bf16.msra.mxu0 %v657
  %994 = vmatprep.subr.bf16.mxu0 %v662
  %995 = vmatpush1.bf16.msra.mxu0 %v661
  %996 = vmatprep.subr.bf16.mxu0 %v666
  %997 = vmatpush1.bf16.msra.mxu0 %v665
  %998 = vmatprep.subr.bf16.mxu0 %v670
  %999 = vmatpush1.bf16.msra.mxu0 %v669
  %1000 = vmatprep.subr.bf16.mxu0 %v674
  %1001 = vmatpush1.bf16.msra.mxu0 %v673
  %1002 = vmatprep.subr.bf16.mxu0 %v678
  %1003 = vmatpush1.bf16.msra.mxu0 %v677
  %1004 = vmatprep.subr.bf16.mxu0 0
  %1005 = vmatpush1.bf16.msra.mxu0 0
  %1006 = vmatprep.subr.bf16.mxu0 0
  %1007 = vmatpush1.bf16.msra.mxu0 0
  %1008 = vmatprep.subr.bf16.mxu0 0
  %1009 = vmatpush1.bf16.msra.mxu0 0
  %1010 = vmatprep.subr.bf16.mxu0 0
  %1011 = vmatpush1.bf16.msra.mxu0 0
  %1012 = vmatprep.subr.bf16.mxu0 0
  %1013 = vmatpush1.bf16.msra.mxu0 0
  %1014 = vmatprep.subr.bf16.mxu0 0
  %1015 = vmatpush1.bf16.msra.mxu0 0
  %1016 = vmatprep.subr.bf16.mxu0 0
  %1017 = vmatpush1.bf16.msra.mxu0 0
  %1018 = vmatprep.subr.bf16.mxu0 0
  %1019 = vmatpush1.bf16.msra.mxu0 0
  %1020 = vmatprep.mubr.bf16.mxu0 0
  %1021 = vmatmul.mubr.bf16.gmra.mrb[0].mxu0 %v946
  %v1022 = vpop.f32.mrb[0].mxu0
  %v1023 = vadd.f32 0.0, %v1022
  %v1024 = vpop.f32.mrb[0].mxu0
  %v1025 = vadd.f32 0.0, %v1024
  %v1026 = vpop.f32.mrb[0].mxu0
  %v1027 = vpop.f32.mrb[0].mxu0
  %1028 = vdwg.mxu0
  %v1029 = vadd.f32 %v942, %v982
  %v1030 = vadd.f32 %v943, %v984
  %v1031 = vadd.f32 %v944, %v1023
  %v1032 = vadd.f32 %v945, %v1025
  %v1033 = vxor.u32 %v1029, 2147483648
  %v1034 = vmul.f32 %v1033, 1.442695
  %v1035 = vpow.pop %v1034
  %v1036 = vadd.f32 %v1035, 1.0
  %v1037 = vrcp.pop %v1036
  %v1038 = vmul.f32 1.0, %v1037
  %v1039 = vxor.u32 %v1030, 2147483648
  %v1040 = vmul.f32 %v1039, 1.442695
  %v1041 = vpow.pop %v1040
  %v1042 = vadd.f32 %v1041, 1.0
  %v1043 = vrcp.pop %v1042
  %v1044 = vmul.f32 1.0, %v1043
  %v1045 = vtanh.pop %v1031
  %v1046 = vxor.u32 %v1032, 2147483648
  %v1047 = vmul.f32 %v1046, 1.442695
  %v1048 = vpow.pop %v1047
  %v1049 = vadd.f32 %v1048, 1.0
  %v1050 = vrcp.pop %v1049
  %v1051 = vmul.f32 1.0, %v1050
  %v1052 = vmul.f32 %v1044, %v936
  %v1053 = vmul.f32 %v1038, %v1045
  %v1054 = vadd.f32 %v1052, %v1053
  %v1055 = vtanh.pop %v1054
  %v1056 = vmul.f32 %v1051, %v1055
  %s1057 = smul.u32 3, 4
  %s1058 = smul.addr %s1057, 8
  %s1059 = scalar_lea.vmem [#allocation2], %s1058
  %v1060 = vld [vmem:[%s1059] sm:$0xff]
  %v1061 = vld [vmem:[%s1059 + $0x8] sm:$0xff]
  %v1062 = vld [vmem:[%s1059 + $0x10] sm:$0xff]
  %v1063 = vld [vmem:[%s1059 + $0x18] sm:$0xff]
  %v1064 = vpack.c.bf16 %v1056, %v1056
  %1065 = vmatprep.subr.bf16.mxu0 %v648
  %1066 = vmatpush1.bf16.msra.mxu0 %v647
  %1067 = vmatprep.subr.bf16.mxu0 %v652
  %1068 = vmatpush1.bf16.msra.mxu0 %v651
  %1069 = vmatprep.subr.bf16.mxu0 %v656
  %1070 = vmatpush1.bf16.msra.mxu0 %v655
  %1071 = vmatprep.subr.bf16.mxu0 %v660
  %1072 = vmatpush1.bf16.msra.mxu0 %v659
  %1073 = vmatprep.subr.bf16.mxu0 %v664
  %1074 = vmatpush1.bf16.msra.mxu0 %v663
  %1075 = vmatprep.subr.bf16.mxu0 %v668
  %1076 = vmatpush1.bf16.msra.mxu0 %v667
  %1077 = vmatprep.subr.bf16.mxu0 %v672
  %1078 = vmatpush1.bf16.msra.mxu0 %v671
  %1079 = vmatprep.subr.bf16.mxu0 %v676
  %1080 = vmatpush1.bf16.msra.mxu0 %v675
  %1081 = vmatprep.subr.bf16.mxu0 0
  %1082 = vmatpush1.bf16.msra.mxu0 0
  %1083 = vmatprep.subr.bf16.mxu0 0
  %1084 = vmatpush1.bf16.msra.mxu0 0
  %1085 = vmatprep.subr.bf16.mxu0 0
  %1086 = vmatpush1.bf16.msra.mxu0 0
  %1087 = vmatprep.subr.bf16.mxu0 0
  %1088 = vmatpush1.bf16.msra.mxu0 0
  %1089 = vmatprep.subr.bf16.mxu0 0
  %1090 = vmatpush1.bf16.msra.mxu0 0
  %1091 = vmatprep.subr.bf16.mxu0 0
  %1092 = vmatpush1.bf16.msra.mxu0 0
  %1093 = vmatprep.subr.bf16.mxu0 0
  %1094 = vmatpush1.bf16.msra.mxu0 0
  %1095 = vmatprep.subr.bf16.mxu0 0
  %1096 = vmatpush1.bf16.msra.mxu0 0
  %1097 = vmatprep.mubr.bf16.mxu0 0
  %1098 = vmatmul.mubr.bf16.gmra.mrb[0].mxu0 %v1064
  %v1099 = vpop.f32.mrb[0].mxu0
  %v1100 = vadd.f32 0.0, %v1099
  %v1101 = vpop.f32.mrb[0].mxu0
  %v1102 = vadd.f32 0.0, %v1101
  %v1103 = vpop.f32.mrb[0].mxu0
  %v1104 = vpop.f32.mrb[0].mxu0
  %1105 = vdwg.mxu0
  %1106 = vmatprep.subr.bf16.mxu0 %v650
  %1107 = vmatpush1.bf16.msra.mxu0 %v649
  %1108 = vmatprep.subr.bf16.mxu0 %v654
  %1109 = vmatpush1.bf16.msra.mxu0 %v653
  %1110 = vmatprep.subr.bf16.mxu0 %v658
  %1111 = vmatpush1.bf16.msra.mxu0 %v657
  %1112 = vmatprep.subr.bf16.mxu0 %v662
  %1113 = vmatpush1.bf16.msra.mxu0 %v661
  %1114 = vmatprep.subr.bf16.mxu0 %v666
  %1115 = vmatpush1.bf16.msra.mxu0 %v665
  %1116 = vmatprep.subr.bf16.mxu0 %v670
  %1117 = vmatpush1.bf16.msra.mxu0 %v669
  %1118 = vmatprep.subr.bf16.mxu0 %v674
  %1119 = vmatpush1.bf16.msra.mxu0 %v673
  %1120 = vmatprep.subr.bf16.mxu0 %v678
  %1121 = vmatpush1.bf16.msra.mxu0 %v677
  %1122 = vmatprep.subr.bf16.mxu0 0
  %1123 = vmatpush1.bf16.msra.mxu0 0
  %1124 = vmatprep.subr.bf16.mxu0 0
  %1125 = vmatpush1.bf16.msra.mxu0 0
  %1126 = vmatprep.subr.bf16.mxu0 0
  %1127 = vmatpush1.bf16.msra.mxu0 0
  %1128 = vmatprep.subr.bf16.mxu0 0
  %1129 = vmatpush1.bf16.msra.mxu0 0
  %1130 = vmatprep.subr.bf16.mxu0 0
  %1131 = vmatpush1.bf16.msra.mxu0 0
  %1132 = vmatprep.subr.bf16.mxu0 0
  %1133 = vmatpush1.bf16.msra.mxu0 0
  %1134 = vmatprep.subr.bf16.mxu0 0
  %1135 = vmatpush1.bf16.msra.mxu0 0
  %1136 = vmatprep.subr.bf16.mxu0 0
  %1137 = vmatpush1.bf16.msra.mxu0 0
  %1138 = vmatprep.mubr.bf16.mxu0 0
  %1139 = vmatmul.mubr.bf16.gmra.mrb[0].mxu0 %v1064
  %v1140 = vpop.f32.mrb[0].mxu0
  %v1141 = vadd.f32 0.0, %v1140
  %v1142 = vpop.f32.mrb[0].mxu0
  %v1143 = vadd.f32 0.0, %v1142
  %v1144 = vpop.f32.mrb[0].mxu0
  %v1145 = vpop.f32.mrb[0].mxu0
  %1146 = vdwg.mxu0
  %v1147 = vadd.f32 %v1060, %v1100
  %v1148 = vadd.f32 %v1061, %v1102
  %v1149 = vadd.f32 %v1062, %v1141
  %v1150 = vadd.f32 %v1063, %v1143
  %v1151 = vxor.u32 %v1147, 2147483648
  %v1152 = vmul.f32 %v1151, 1.442695
  %v1153 = vpow.pop %v1152
  %v1154 = vadd.f32 %v1153, 1.0
  %v1155 = vrcp.pop %v1154
  %v1156 = vmul.f32 1.0, %v1155
  %v1157 = vxor.u32 %v1148, 2147483648
  %v1158 = vmul.f32 %v1157, 1.442695
  %v1159 = vpow.pop %v1158
  %v1160 = vadd.f32 %v1159, 1.0
  %v1161 = vrcp.pop %v1160
  %v1162 = vmul.f32 1.0, %v1161
  %v1163 = vtanh.pop %v1149
  %v1164 = vxor.u32 %v1150, 2147483648
  %v1165 = vmul.f32 %v1164, 1.442695
  %v1166 = vpow.pop %v1165
  %v1167 = vadd.f32 %v1166, 1.0
  %v1168 = vrcp.pop %v1167
  %v1169 = vmul.f32 1.0, %v1168
  %v1170 = vmul.f32 %v1162, %v1054
  %v1171 = vmul.f32 %v1156, %v1163
  %v1172 = vadd.f32 %v1170, %v1171
  %v1173 = vtanh.pop %v1172
  %v1174 = vmul.f32 %v1169, %v1173
  %s1175 = smul.u32 4, 4
  %s1176 = smul.addr %s1175, 8
  %s1177 = scalar_lea.vmem [#allocation2], %s1176
  %v1178 = vld [vmem:[%s1177] sm:$0xff]
  %v1179 = vld [vmem:[%s1177 + $0x8] sm:$0xff]
  %v1180 = vld [vmem:[%s1177 + $0x10] sm:$0xff]
  %v1181 = vld [vmem:[%s1177 + $0x18] sm:$0xff]
  %v1182 = vpack.c.bf16 %v1174, %v1174
  %1183 = vmatprep.subr.bf16.mxu0 %v648
  %1184 = vmatpush1.bf16.msra.mxu0 %v647
  %1185 = vmatprep.subr.bf16.mxu0 %v652
  %1186 = vmatpush1.bf16.msra.mxu0 %v651
  %1187 = vmatprep.subr.bf16.mxu0 %v656
  %1188 = vmatpush1.bf16.msra.mxu0 %v655
  %1189 = vmatprep.subr.bf16.mxu0 %v660
  %1190 = vmatpush1.bf16.msra.mxu0 %v659
  %1191 = vmatprep.subr.bf16.mxu0 %v664
  %1192 = vmatpush1.bf16.msra.mxu0 %v663
  %1193 = vmatprep.subr.bf16.mxu0 %v668
  %1194 = vmatpush1.bf16.msra.mxu0 %v667
  %1195 = vmatprep.subr.bf16.mxu0 %v672
  %1196 = vmatpush1.bf16.msra.mxu0 %v671
  %1197 = vmatprep.subr.bf16.mxu0 %v676
  %1198 = vmatpush1.bf16.msra.mxu0 %v675
  %1199 = vmatprep.subr.bf16.mxu0 0
  %1200 = vmatpush1.bf16.msra.mxu0 0
  %1201 = vmatprep.subr.bf16.mxu0 0
  %1202 = vmatpush1.bf16.msra.mxu0 0
  %1203 = vmatprep.subr.bf16.mxu0 0
  %1204 = vmatpush1.bf16.msra.mxu0 0
  %1205 = vmatprep.subr.bf16.mxu0 0
  %1206 = vmatpush1.bf16.msra.mxu0 0
  %1207 = vmatprep.subr.bf16.mxu0 0
  %1208 = vmatpush1.bf16.msra.mxu0 0
  %1209 = vmatprep.subr.bf16.mxu0 0
  %1210 = vmatpush1.bf16.msra.mxu0 0
  %1211 = vmatprep.subr.bf16.mxu0 0
  %1212 = vmatpush1.bf16.msra.mxu0 0
  %1213 = vmatprep.subr.bf16.mxu0 0
  %1214 = vmatpush1.bf16.msra.mxu0 0
  %1215 = vmatprep.mubr.bf16.mxu0 0
  %1216 = vmatmul.mubr.bf16.gmra.mrb[0].mxu0 %v1182
  %v1217 = vpop.f32.mrb[0].mxu0
  %v1218 = vadd.f32 0.0, %v1217
  %v1219 = vpop.f32.mrb[0].mxu0
  %v1220 = vadd.f32 0.0, %v1219
  %v1221 = vpop.f32.mrb[0].mxu0
  %v1222 = vpop.f32.mrb[0].mxu0
  %1223 = vdwg.mxu0
  %1224 = vmatprep.subr.bf16.mxu0 %v650
  %1225 = vmatpush1.bf16.msra.mxu0 %v649
  %1226 = vmatprep.subr.bf16.mxu0 %v654
  %1227 = vmatpush1.bf16.msra.mxu0 %v653
  %1228 = vmatprep.subr.bf16.mxu0 %v658
  %1229 = vmatpush1.bf16.msra.mxu0 %v657
  %1230 = vmatprep.subr.bf16.mxu0 %v662
  %1231 = vmatpush1.bf16.msra.mxu0 %v661
  %1232 = vmatprep.subr.bf16.mxu0 %v666
  %1233 = vmatpush1.bf16.msra.mxu0 %v665
  %1234 = vmatprep.subr.bf16.mxu0 %v670
  %1235 = vmatpush1.bf16.msra.mxu0 %v669
  %1236 = vmatprep.subr.bf16.mxu0 %v674
  %1237 = vmatpush1.bf16.msra.mxu0 %v673
  %1238 = vmatprep.subr.bf16.mxu0 %v678
  %1239 = vmatpush1.bf16.msra.mxu0 %v677
  %1240 = vmatprep.subr.bf16.mxu0 0
  %1241 = vmatpush1.bf16.msra.mxu0 0
  %1242 = vmatprep.subr.bf16.mxu0 0
  %1243 = vmatpush1.bf16.msra.mxu0 0
  %1244 = vmatprep.subr.bf16.mxu0 0
  %1245 = vmatpush1.bf16.msra.mxu0 0
  %1246 = vmatprep.subr.bf16.mxu0 0
  %1247 = vmatpush1.bf16.msra.mxu0 0
  %1248 = vmatprep.subr.bf16.mxu0 0
  %1249 = vmatpush1.bf16.msra.mxu0 0
  %1250 = vmatprep.subr.bf16.mxu0 0
  %1251 = vmatpush1.bf16.msra.mxu0 0
  %1252 = vmatprep.subr.bf16.mxu0 0
  %1253 = vmatpush1.bf16.msra.mxu0 0
  %1254 = vmatprep.subr.bf16.mxu0 0
  %1255 = vmatpush1.bf16.msra.mxu0 0
  %1256 = vmatprep.mubr.bf16.mxu0 0
  %1257 = vmatmul.mubr.bf16.gmra.mrb[0].mxu0 %v1182
  %v1258 = vpop.f32.mrb[0].mxu0
  %v1259 = vadd.f32 0.0, %v1258
  %v1260 = vpop.f32.mrb[0].mxu0
  %v1261 = vadd.f32 0.0, %v1260
  %v1262 = vpop.f32.mrb[0].mxu0
  %v1263 = vpop.f32.mrb[0].mxu0
  %1264 = vdwg.mxu0
  %v1265 = vadd.f32 %v1178, %v1218
  %v1266 = vadd.f32 %v1179, %v1220
  %v1267 = vadd.f32 %v1180, %v1259
  %v1268 = vadd.f32 %v1181, %v1261
  %v1269 = vxor.u32 %v1265, 2147483648
  %v1270 = vmul.f32 %v1269, 1.442695
  %v1271 = vpow.pop %v1270
  %v1272 = vadd.f32 %v1271, 1.0
  %v1273 = vrcp.pop %v1272
  %v1274 = vmul.f32 1.0, %v1273
  %v1275 = vxor.u32 %v1266, 2147483648
  %v1276 = vmul.f32 %v1275, 1.442695
  %v1277 = vpow.pop %v1276
  %v1278 = vadd.f32 %v1277, 1.0
  %v1279 = vrcp.pop %v1278
  %v1280 = vmul.f32 1.0, %v1279
  %v1281 = vtanh.pop %v1267
  %v1282 = vxor.u32 %v1268, 2147483648
  %v1283 = vmul.f32 %v1282, 1.442695
  %v1284 = vpow.pop %v1283
  %v1285 = vadd.f32 %v1284, 1.0
  %v1286 = vrcp.pop %v1285
  %v1287 = vmul.f32 1.0, %v1286
  %v1288 = vmul.f32 %v1280, %v1172
  %v1289 = vmul.f32 %v1274, %v1281
  %v1290 = vadd.f32 %v1288, %v1289
  %v1291 = vtanh.pop %v1290
  %v1292 = vmul.f32 %v1287, %v1291
  %s1293 = smul.u32 5, 4
  %s1294 = smul.addr %s1293, 8
  %s1295 = scalar_lea.vmem [#allocation2], %s1294
  %v1296 = vld [vmem:[%s1295] sm:$0xff]
  %v1297 = vld [vmem:[%s1295 + $0x8] sm:$0xff]
  %v1298 = vld [vmem:[%s1295 + $0x10] sm:$0xff]
  %v1299 = vld [vmem:[%s1295 + $0x18] sm:$0xff]
  %v1300 = vpack.c.bf16 %v1292, %v1292
  %1301 = vmatprep.subr.bf16.mxu0 %v648
  %1302 = vmatpush1.bf16.msra.mxu0 %v647
  %1303 = vmatprep.subr.bf16.mxu0 %v652
  %1304 = vmatpush1.bf16.msra.mxu0 %v651
  %1305 = vmatprep.subr.bf16.mxu0 %v656
  %1306 = vmatpush1.bf16.msra.mxu0 %v655
  %1307 = vmatprep.subr.bf16.mxu0 %v660
  %1308 = vmatpush1.bf16.msra.mxu0 %v659
  %1309 = vmatprep.subr.bf16.mxu0 %v664
  %1310 = vmatpush1.bf16.msra.mxu0 %v663
  %1311 = vmatprep.subr.bf16.mxu0 %v668
  %1312 = vmatpush1.bf16.msra.mxu0 %v667
  %1313 = vmatprep.subr.bf16.mxu0 %v672
  %1314 = vmatpush1.bf16.msra.mxu0 %v671
  %1315 = vmatprep.subr.bf16.mxu0 %v676
  %1316 = vmatpush1.bf16.msra.mxu0 %v675
  %1317 = vmatprep.subr.bf16.mxu0 0
  %1318 = vmatpush1.bf16.msra.mxu0 0
  %1319 = vmatprep.subr.bf16.mxu0 0
  %1320 = vmatpush1.bf16.msra.mxu0 0
  %1321 = vmatprep.subr.bf16.mxu0 0
  %1322 = vmatpush1.bf16.msra.mxu0 0
  %1323 = vmatprep.subr.bf16.mxu0 0
  %1324 = vmatpush1.bf16.msra.mxu0 0
  %1325 = vmatprep.subr.bf16.mxu0 0
  %1326 = vmatpush1.bf16.msra.mxu0 0
  %1327 = vmatprep.subr.bf16.mxu0 0
  %1328 = vmatpush1.bf16.msra.mxu0 0
  %1329 = vmatprep.subr.bf16.mxu0 0
  %1330 = vmatpush1.bf16.msra.mxu0 0
  %1331 = vmatprep.subr.bf16.mxu0 0
  %1332 = vmatpush1.bf16.msra.mxu0 0
  %1333 = vmatprep.mubr.bf16.mxu0 0
  %1334 = vmatmul.mubr.bf16.gmra.mrb[0].mxu0 %v1300
  %v1335 = vpop.f32.mrb[0].mxu0
  %v1336 = vadd.f32 0.0, %v1335
  %v1337 = vpop.f32.mrb[0].mxu0
  %v1338 = vadd.f32 0.0, %v1337
  %v1339 = vpop.f32.mrb[0].mxu0
  %v1340 = vpop.f32.mrb[0].mxu0
  %1341 = vdwg.mxu0
  %1342 = vmatprep.subr.bf16.mxu0 %v650
  %1343 = vmatpush1.bf16.msra.mxu0 %v649
  %1344 = vmatprep.subr.bf16.mxu0 %v654
  %1345 = vmatpush1.bf16.msra.mxu0 %v653
  %1346 = vmatprep.subr.bf16.mxu0 %v658
  %1347 = vmatpush1.bf16.msra.mxu0 %v657
  %1348 = vmatprep.subr.bf16.mxu0 %v662
  %1349 = vmatpush1.bf16.msra.mxu0 %v661
  %1350 = vmatprep.subr.bf16.mxu0 %v666
  %1351 = vmatpush1.bf16.msra.mxu0 %v665
  %1352 = vmatprep.subr.bf16.mxu0 %v670
  %1353 = vmatpush1.bf16.msra.mxu0 %v669
  %1354 = vmatprep.subr.bf16.mxu0 %v674
  %1355 = vmatpush1.bf16.msra.mxu0 %v673
  %1356 = vmatprep.subr.bf16.mxu0 %v678
  %1357 = vmatpush1.bf16.msra.mxu0 %v677
  %1358 = vmatprep.subr.bf16.mxu0 0
  %1359 = vmatpush1.bf16.msra.mxu0 0
  %1360 = vmatprep.subr.bf16.mxu0 0
  %1361 = vmatpush1.bf16.msra.mxu0 0
  %1362 = vmatprep.subr.bf16.mxu0 0
  %1363 = vmatpush1.bf16.msra.mxu0 0
  %1364 = vmatprep.subr.bf16.mxu0 0
  %1365 = vmatpush1.bf16.msra.mxu0 0
  %1366 = vmatprep.subr.bf16.mxu0 0
  %1367 = vmatpush1.bf16.msra.mxu0 0
  %1368 = vmatprep.subr.bf16.mxu0 0
  %1369 = vmatpush1.bf16.msra.mxu0 0
  %1370 = vmatprep.subr.bf16.mxu0 0
  %1371 = vmatpush1.bf16.msra.mxu0 0
  %1372 = vmatprep.subr.bf16.mxu0 0
  %1373 = vmatpush1.bf16.msra.mxu0 0
  %1374 = vmatprep.mubr.bf16.mxu0 0
  %1375 = vmatmul.mubr.bf16.gmra.mrb[0].mxu0 %v1300
  %v1376 = vpop.f32.mrb[0].mxu0
  %v1377 = vadd.f32 0.0, %v1376
  %v1378 = vpop.f32.mrb[0].mxu0
  %v1379 = vadd.f32 0.0, %v1378
  %v1380 = vpop.f32.mrb[0].mxu0
  %v1381 = vpop.f32.mrb[0].mxu0
  %1382 = vdwg.mxu0
  %v1383 = vadd.f32 %v1296, %v1336
  %v1384 = vadd.f32 %v1297, %v1338
  %v1385 = vadd.f32 %v1298, %v1377
  %v1386 = vadd.f32 %v1299, %v1379
  %v1387 = vxor.u32 %v1383, 2147483648
  %v1388 = vmul.f32 %v1387, 1.442695
  %v1389 = vpow.pop %v1388
  %v1390 = vadd.f32 %v1389, 1.0
  %v1391 = vrcp.pop %v1390
  %v1392 = vmul.f32 1.0, %v1391
  %v1393 = vxor.u32 %v1384, 2147483648
  %v1394 = vmul.f32 %v1393, 1.442695
  %v1395 = vpow.pop %v1394
  %v1396 = vadd.f32 %v1395, 1.0
  %v1397 = vrcp.pop %v1396
  %v1398 = vmul.f32 1.0, %v1397
  %v1399 = vtanh.pop %v1385
  %v1400 = vxor.u32 %v1386, 2147483648
  %v1401 = vmul.f32 %v1400, 1.442695
  %v1402 = vpow.pop %v1401
  %v1403 = vadd.f32 %v1402, 1.0
  %v1404 = vrcp.pop %v1403
  %v1405 = vmul.f32 1.0, %v1404
  %v1406 = vmul.f32 %v1398, %v1290
  %v1407 = vmul.f32 %v1392, %v1399
  %v1408 = vadd.f32 %v1406, %v1407
  %v1409 = vtanh.pop %v1408
  %v1410 = vmul.f32 %v1405, %v1409
  %s1411 = smul.u32 6, 4
  %s1412 = smul.addr %s1411, 8
  %s1413 = scalar_lea.vmem [#allocation2], %s1412
  %v1414 = vld [vmem:[%s1413] sm:$0xff]
  %v1415 = vld [vmem:[%s1413 + $0x8] sm:$0xff]
  %v1416 = vld [vmem:[%s1413 + $0x10] sm:$0xff]
  %v1417 = vld [vmem:[%s1413 + $0x18] sm:$0xff]
  %v1418 = vpack.c.bf16 %v1410, %v1410
  %1419 = vmatprep.subr.bf16.mxu0 %v648
  %1420 = vmatpush1.bf16.msra.mxu0 %v647
  %1421 = vmatprep.subr.bf16.mxu0 %v652
  %1422 = vmatpush1.bf16.msra.mxu0 %v651
  %1423 = vmatprep.subr.bf16.mxu0 %v656
  %1424 = vmatpush1.bf16.msra.mxu0 %v655
  %1425 = vmatprep.subr.bf16.mxu0 %v660
  %1426 = vmatpush1.bf16.msra.mxu0 %v659
  %1427 = vmatprep.subr.bf16.mxu0 %v664
  %1428 = vmatpush1.bf16.msra.mxu0 %v663
  %1429 = vmatprep.subr.bf16.mxu0 %v668
  %1430 = vmatpush1.bf16.msra.mxu0 %v667
  %1431 = vmatprep.subr.bf16.mxu0 %v672
  %1432 = vmatpush1.bf16.msra.mxu0 %v671
  %1433 = vmatprep.subr.bf16.mxu0 %v676
  %1434 = vmatpush1.bf16.msra.mxu0 %v675
  %1435 = vmatprep.subr.bf16.mxu0 0
  %1436 = vmatpush1.bf16.msra.mxu0 0
  %1437 = vmatprep.subr.bf16.mxu0 0
  %1438 = vmatpush1.bf16.msra.mxu0 0
  %1439 = vmatprep.subr.bf16.mxu0 0
  %1440 = vmatpush1.bf16.msra.mxu0 0
  %1441 = vmatprep.subr.bf16.mxu0 0
  %1442 = vmatpush1.bf16.msra.mxu0 0
  %1443 = vmatprep.subr.bf16.mxu0 0
  %1444 = vmatpush1.bf16.msra.mxu0 0
  %1445 = vmatprep.subr.bf16.mxu0 0
  %1446 = vmatpush1.bf16.msra.mxu0 0
  %1447 = vmatprep.subr.bf16.mxu0 0
  %1448 = vmatpush1.bf16.msra.mxu0 0
  %1449 = vmatprep.subr.bf16.mxu0 0
  %1450 = vmatpush1.bf16.msra.mxu0 0
  %1451 = vmatprep.mubr.bf16.mxu0 0
  %1452 = vmatmul.mubr.bf16.gmra.mrb[0].mxu0 %v1418
  %v1453 = vpop.f32.mrb[0].mxu0
  %v1454 = vadd.f32 0.0, %v1453
  %v1455 = vpop.f32.mrb[0].mxu0
  %v1456 = vadd.f32 0.0, %v1455
  %v1457 = vpop.f32.mrb[0].mxu0
  %v1458 = vpop.f32.mrb[0].mxu0
  %1459 = vdwg.mxu0
  %1460 = vmatprep.subr.bf16.mxu0 %v650
  %1461 = vmatpush1.bf16.msra.mxu0 %v649
  %1462 = vmatprep.subr.bf16.mxu0 %v654
  %1463 = vmatpush1.bf16.msra.mxu0 %v653
  %1464 = vmatprep.subr.bf16.mxu0 %v658
  %1465 = vmatpush1.bf16.msra.mxu0 %v657
  %1466 = vmatprep.subr.bf16.mxu0 %v662
  %1467 = vmatpush1.bf16.msra.mxu0 %v661
  %1468 = vmatprep.subr.bf16.mxu0 %v666
  %1469 = vmatpush1.bf16.msra.mxu0 %v665
  %1470 = vmatprep.subr.bf16.mxu0 %v670
  %1471 = vmatpush1.bf16.msra.mxu0 %v669
  %1472 = vmatprep.subr.bf16.mxu0 %v674
  %1473 = vmatpush1.bf16.msra.mxu0 %v673
  %1474 = vmatprep.subr.bf16.mxu0 %v678
  %1475 = vmatpush1.bf16.msra.mxu0 %v677
  %1476 = vmatprep.subr.bf16.mxu0 0
  %1477 = vmatpush1.bf16.msra.mxu0 0
  %1478 = vmatprep.subr.bf16.mxu0 0
  %1479 = vmatpush1.bf16.msra.mxu0 0
  %1480 = vmatprep.subr.bf16.mxu0 0
  %1481 = vmatpush1.bf16.msra.mxu0 0
  %1482 = vmatprep.subr.bf16.mxu0 0
  %1483 = vmatpush1.bf16.msra.mxu0 0
  %1484 = vmatprep.subr.bf16.mxu0 0
  %1485 = vmatpush1.bf16.msra.mxu0 0
  %1486 = vmatprep.subr.bf16.mxu0 0
  %1487 = vmatpush1.bf16.msra.mxu0 0
  %1488 = vmatprep.subr.bf16.mxu0 0
  %1489 = vmatpush1.bf16.msra.mxu0 0
  %1490 = vmatprep.subr.bf16.mxu0 0
  %1491 = vmatpush1.bf16.msra.mxu0 0
  %1492 = vmatprep.mubr.bf16.mxu0 0
  %1493 = vmatmul.mubr.bf16.gmra.mrb[0].mxu0 %v1418
  %v1494 = vpop.f32.mrb[0].mxu0
  %v1495 = vadd.f32 0.0, %v1494
  %v1496 = vpop.f32.mrb[0].mxu0
  %v1497 = vadd.f32 0.0, %v1496
  %v1498 = vpop.f32.mrb[0].mxu0
  %v1499 = vpop.f32.mrb[0].mxu0
  %1500 = vdwg.mxu0
  %v1501 = vadd.f32 %v1414, %v1454
  %v1502 = vadd.f32 %v1415, %v1456
  %v1503 = vadd.f32 %v1416, %v1495
  %v1504 = vadd.f32 %v1417, %v1497
  %v1505 = vxor.u32 %v1501, 2147483648
  %v1506 = vmul.f32 %v1505, 1.442695
  %v1507 = vpow.pop %v1506
  %v1508 = vadd.f32 %v1507, 1.0
  %v1509 = vrcp.pop %v1508
  %v1510 = vmul.f32 1.0, %v1509
  %v1511 = vxor.u32 %v1502, 2147483648
  %v1512 = vmul.f32 %v1511, 1.442695
  %v1513 = vpow.pop %v1512
  %v1514 = vadd.f32 %v1513, 1.0
  %v1515 = vrcp.pop %v1514
  %v1516 = vmul.f32 1.0, %v1515
  %v1517 = vtanh.pop %v1503
  %v1518 = vxor.u32 %v1504, 2147483648
  %v1519 = vmul.f32 %v1518, 1.442695
  %v1520 = vpow.pop %v1519
  %v1521 = vadd.f32 %v1520, 1.0
  %v1522 = vrcp.pop %v1521
  %v1523 = vmul.f32 1.0, %v1522
  %v1524 = vmul.f32 %v1516, %v1408
  %v1525 = vmul.f32 %v1510, %v1517
  %v1526 = vadd.f32 %v1524, %v1525
  %v1527 = vtanh.pop %v1526
  %v1528 = vmul.f32 %v1523, %v1527
  %s1529 = smul.u32 7, 4
  %s1530 = smul.addr %s1529, 8
  %s1531 = scalar_lea.vmem [#allocation2], %s1530
  %v1532 = vld [vmem:[%s1531] sm:$0xff]
  %v1533 = vld [vmem:[%s1531 + $0x8] sm:$0xff]
  %v1534 = vld [vmem:[%s1531 + $0x10] sm:$0xff]
  %v1535 = vld [vmem:[%s1531 + $0x18] sm:$0xff]
  %v1536 = vpack.c.bf16 %v1528, %v1528
  %1537 = vmatprep.subr.bf16.mxu0 %v648
  %1538 = vmatpush1.bf16.msra.mxu0 %v647
  %1539 = vmatprep.subr.bf16.mxu0 %v652
  %1540 = vmatpush1.bf16.msra.mxu0 %v651
  %1541 = vmatprep.subr.bf16.mxu0 %v656
  %1542 = vmatpush1.bf16.msra.mxu0 %v655
  %1543 = vmatprep.subr.bf16.mxu0 %v660
  %1544 = vmatpush1.bf16.msra.mxu0 %v659
  %1545 = vmatprep.subr.bf16.mxu0 %v664
  %1546 = vmatpush1.bf16.msra.mxu0 %v663
  %1547 = vmatprep.subr.bf16.mxu0 %v668
  %1548 = vmatpush1.bf16.msra.mxu0 %v667
  %1549 = vmatprep.subr.bf16.mxu0 %v672
  %1550 = vmatpush1.bf16.msra.mxu0 %v671
  %1551 = vmatprep.subr.bf16.mxu0 %v676
  %1552 = vmatpush1.bf16.msra.mxu0 %v675
  %1553 = vmatprep.subr.bf16.mxu0 0
  %1554 = vmatpush1.bf16.msra.mxu0 0
  %1555 = vmatprep.subr.bf16.mxu0 0
  %1556 = vmatpush1.bf16.msra.mxu0 0
  %1557 = vmatprep.subr.bf16.mxu0 0
  %1558 = vmatpush1.bf16.msra.mxu0 0
  %1559 = vmatprep.subr.bf16.mxu0 0
  %1560 = vmatpush1.bf16.msra.mxu0 0
  %1561 = vmatprep.subr.bf16.mxu0 0
  %1562 = vmatpush1.bf16.msra.mxu0 0
  %1563 = vmatprep.subr.bf16.mxu0 0
  %1564 = vmatpush1.bf16.msra.mxu0 0
  %1565 = vmatprep.subr.bf16.mxu0 0
  %1566 = vmatpush1.bf16.msra.mxu0 0
  %1567 = vmatprep.subr.bf16.mxu0 0
  %1568 = vmatpush1.bf16.msra.mxu0 0
  %1569 = vmatprep.mubr.bf16.mxu0 0
  %1570 = vmatmul.mubr.bf16.gmra.mrb[0].mxu0 %v1536
  %v1571 = vpop.f32.mrb[0].mxu0
  %v1572 = vadd.f32 0.0, %v1571
  %v1573 = vpop.f32.mrb[0].mxu0
  %v1574 = vadd.f32 0.0, %v1573
  %v1575 = vpop.f32.mrb[0].mxu0
  %v1576 = vpop.f32.mrb[0].mxu0
  %1577 = vdwg.mxu0
  %1578 = vmatprep.subr.bf16.mxu0 %v650
  %1579 = vmatpush1.bf16.msra.mxu0 %v649
  %1580 = vmatprep.subr.bf16.mxu0 %v654
  %1581 = vmatpush1.bf16.msra.mxu0 %v653
  %1582 = vmatprep.subr.bf16.mxu0 %v658
  %1583 = vmatpush1.bf16.msra.mxu0 %v657
  %1584 = vmatprep.subr.bf16.mxu0 %v662
  %1585 = vmatpush1.bf16.msra.mxu0 %v661
  %1586 = vmatprep.subr.bf16.mxu0 %v666
  %1587 = vmatpush1.bf16.msra.mxu0 %v665
  %1588 = vmatprep.subr.bf16.mxu0 %v670
  %1589 = vmatpush1.bf16.msra.mxu0 %v669
  %1590 = vmatprep.subr.bf16.mxu0 %v674
  %1591 = vmatpush1.bf16.msra.mxu0 %v673
  %1592 = vmatprep.subr.bf16.mxu0 %v678
  %1593 = vmatpush1.bf16.msra.mxu0 %v677
  %1594 = vmatprep.subr.bf16.mxu0 0
  %1595 = vmatpush1.bf16.msra.mxu0 0
  %1596 = vmatprep.subr.bf16.mxu0 0
  %1597 = vmatpush1.bf16.msra.mxu0 0
  %1598 = vmatprep.subr.bf16.mxu0 0
  %1599 = vmatpush1.bf16.msra.mxu0 0
  %1600 = vmatprep.subr.bf16.mxu0 0
  %1601 = vmatpush1.bf16.msra.mxu0 0
  %1602 = vmatprep.subr.bf16.mxu0 0
  %1603 = vmatpush1.bf16.msra.mxu0 0
  %1604 = vmatprep.subr.bf16.mxu0 0
  %1605 = vmatpush1.bf16.msra.mxu0 0
  %1606 = vmatprep.subr.bf16.mxu0 0
  %1607 = vmatpush1.bf16.msra.mxu0 0
  %1608 = vmatprep.subr.bf16.mxu0 0
  %1609 = vmatpush1.bf16.msra.mxu0 0
  %1610 = vmatprep.mubr.bf16.mxu0 0
  %1611 = vmatmul.mubr.bf16.gmra.mrb[0].mxu0 %v1536
  %v1612 = vpop.f32.mrb[0].mxu0
  %v1613 = vadd.f32 0.0, %v1612
  %v1614 = vpop.f32.mrb[0].mxu0
  %v1615 = vadd.f32 0.0, %v1614
  %v1616 = vpop.f32.mrb[0].mxu0
  %v1617 = vpop.f32.mrb[0].mxu0
  %1618 = vdwg.mxu0
  %v1619 = vadd.f32 %v1532, %v1572
  %v1620 = vadd.f32 %v1533, %v1574
  %v1621 = vadd.f32 %v1534, %v1613
  %v1622 = vadd.f32 %v1535, %v1615
  %v1623 = vxor.u32 %v1619, 2147483648
  %v1624 = vmul.f32 %v1623, 1.442695
  %v1625 = vpow.pop %v1624
  %v1626 = vadd.f32 %v1625, 1.0
  %v1627 = vrcp.pop %v1626
  %v1628 = vmul.f32 1.0, %v1627
  %v1629 = vxor.u32 %v1620, 2147483648
  %v1630 = vmul.f32 %v1629, 1.442695
  %v1631 = vpow.pop %v1630
  %v1632 = vadd.f32 %v1631, 1.0
  %v1633 = vrcp.pop %v1632
  %v1634 = vmul.f32 1.0, %v1633
  %v1635 = vtanh.pop %v1621
  %v1636 = vxor.u32 %v1622, 2147483648
  %v1637 = vmul.f32 %v1636, 1.442695
  %v1638 = vpow.pop %v1637
  %v1639 = vadd.f32 %v1638, 1.0
  %v1640 = vrcp.pop %v1639
  %v1641 = vmul.f32 1.0, %v1640
  %v1642 = vmul.f32 %v1634, %v1526
  %v1643 = vmul.f32 %v1628, %v1635
  %v1644 = vadd.f32 %v1642, %v1643
  %v1645 = vtanh.pop %v1644
  %v1646 = vmul.f32 %v1641, %v1645
  %s1647 = smul.u32 8, 4
  %s1648 = smul.addr %s1647, 8
  %s1649 = scalar_lea.vmem [#allocation2], %s1648
  %v1650 = vld [vmem:[%s1649] sm:$0xff]
  %v1651 = vld [vmem:[%s1649 + $0x8] sm:$0xff]
  %v1652 = vld [vmem:[%s1649 + $0x10] sm:$0xff]
  %v1653 = vld [vmem:[%s1649 + $0x18] sm:$0xff]
  %v1654 = vpack.c.bf16 %v1646, %v1646
  %1655 = vmatprep.subr.bf16.mxu0 %v648
  %1656 = vmatpush1.bf16.msra.mxu0 %v647
  %1657 = vmatprep.subr.bf16.mxu0 %v652
  %1658 = vmatpush1.bf16.msra.mxu0 %v651
  %1659 = vmatprep.subr.bf16.mxu0 %v656
  %1660 = vmatpush1.bf16.msra.mxu0 %v655
  %1661 = vmatprep.subr.bf16.mxu0 %v660
  %1662 = vmatpush1.bf16.msra.mxu0 %v659
  %1663 = vmatprep.subr.bf16.mxu0 %v664
  %1664 = vmatpush1.bf16.msra.mxu0 %v663
  %1665 = vmatprep.subr.bf16.mxu0 %v668
  %1666 = vmatpush1.bf16.msra.mxu0 %v667
  %1667 = vmatprep.subr.bf16.mxu0 %v672
  %1668 = vmatpush1.bf16.msra.mxu0 %v671
  %1669 = vmatprep.subr.bf16.mxu0 %v676
  %1670 = vmatpush1.bf16.msra.mxu0 %v675
  %1671 = vmatprep.subr.bf16.mxu0 0
  %1672 = vmatpush1.bf16.msra.mxu0 0
  %1673 = vmatprep.subr.bf16.mxu0 0
  %1674 = vmatpush1.bf16.msra.mxu0 0
  %1675 = vmatprep.subr.bf16.mxu0 0
  %1676 = vmatpush1.bf16.msra.mxu0 0
  %1677 = vmatprep.subr.bf16.mxu0 0
  %1678 = vmatpush1.bf16.msra.mxu0 0
  %1679 = vmatprep.subr.bf16.mxu0 0
  %1680 = vmatpush1.bf16.msra.mxu0 0
  %1681 = vmatprep.subr.bf16.mxu0 0
  %1682 = vmatpush1.bf16.msra.mxu0 0
  %1683 = vmatprep.subr.bf16.mxu0 0
  %1684 = vmatpush1.bf16.msra.mxu0 0
  %1685 = vmatprep.subr.bf16.mxu0 0
  %1686 = vmatpush1.bf16.msra.mxu0 0
  %1687 = vmatprep.mubr.bf16.mxu0 0
  %1688 = vmatmul.mubr.bf16.gmra.mrb[0].mxu0 %v1654
  %v1689 = vpop.f32.mrb[0].mxu0
  %v1690 = vadd.f32 0.0, %v1689
  %v1691 = vpop.f32.mrb[0].mxu0
  %v1692 = vadd.f32 0.0, %v1691
  %v1693 = vpop.f32.mrb[0].mxu0
  %v1694 = vpop.f32.mrb[0].mxu0
  %1695 = vdwg.mxu0
  %1696 = vmatprep.subr.bf16.mxu0 %v650
  %1697 = vmatpush1.bf16.msra.mxu0 %v649
  %1698 = vmatprep.subr.bf16.mxu0 %v654
  %1699 = vmatpush1.bf16.msra.mxu0 %v653
  %1700 = vmatprep.subr.bf16.mxu0 %v658
  %1701 = vmatpush1.bf16.msra.mxu0 %v657
  %1702 = vmatprep.subr.bf16.mxu0 %v662
  %1703 = vmatpush1.bf16.msra.mxu0 %v661
  %1704 = vmatprep.subr.bf16.mxu0 %v666
  %1705 = vmatpush1.bf16.msra.mxu0 %v665
  %1706 = vmatprep.subr.bf16.mxu0 %v670
  %1707 = vmatpush1.bf16.msra.mxu0 %v669
  %1708 = vmatprep.subr.bf16.mxu0 %v674
  %1709 = vmatpush1.bf16.msra.mxu0 %v673
  %1710 = vmatprep.subr.bf16.mxu0 %v678
  %1711 = vmatpush1.bf16.msra.mxu0 %v677
  %1712 = vmatprep.subr.bf16.mxu0 0
  %1713 = vmatpush1.bf16.msra.mxu0 0
  %1714 = vmatprep.subr.bf16.mxu0 0
  %1715 = vmatpush1.bf16.msra.mxu0 0
  %1716 = vmatprep.subr.bf16.mxu0 0
  %1717 = vmatpush1.bf16.msra.mxu0 0
  %1718 = vmatprep.subr.bf16.mxu0 0
  %1719 = vmatpush1.bf16.msra.mxu0 0
  %1720 = vmatprep.subr.bf16.mxu0 0
  %1721 = vmatpush1.bf16.msra.mxu0 0
  %1722 = vmatprep.subr.bf16.mxu0 0
  %1723 = vmatpush1.bf16.msra.mxu0 0
  %1724 = vmatprep.subr.bf16.mxu0 0
  %1725 = vmatpush1.bf16.msra.mxu0 0
  %1726 = vmatprep.subr.bf16.mxu0 0
  %1727 = vmatpush1.bf16.msra.mxu0 0
  %1728 = vmatprep.mubr.bf16.mxu0 0
  %1729 = vmatmul.mubr.bf16.gmra.mrb[0].mxu0 %v1654
  %v1730 = vpop.f32.mrb[0].mxu0
  %v1731 = vadd.f32 0.0, %v1730
  %v1732 = vpop.f32.mrb[0].mxu0
  %v1733 = vadd.f32 0.0, %v1732
  %v1734 = vpop.f32.mrb[0].mxu0
  %v1735 = vpop.f32.mrb[0].mxu0
  %1736 = vdwg.mxu0
  %v1737 = vadd.f32 %v1650, %v1690
  %v1738 = vadd.f32 %v1651, %v1692
  %v1739 = vadd.f32 %v1652, %v1731
  %v1740 = vadd.f32 %v1653, %v1733
  %v1741 = vxor.u32 %v1737, 2147483648
  %v1742 = vmul.f32 %v1741, 1.442695
  %v1743 = vpow.pop %v1742
  %v1744 = vadd.f32 %v1743, 1.0
  %v1745 = vrcp.pop %v1744
  %v1746 = vmul.f32 1.0, %v1745
  %v1747 = vxor.u32 %v1738, 2147483648
  %v1748 = vmul.f32 %v1747, 1.442695
  %v1749 = vpow.pop %v1748
  %v1750 = vadd.f32 %v1749, 1.0
  %v1751 = vrcp.pop %v1750
  %v1752 = vmul.f32 1.0, %v1751
  %v1753 = vtanh.pop %v1739
  %v1754 = vxor.u32 %v1740, 2147483648
  %v1755 = vmul.f32 %v1754, 1.442695
  %v1756 = vpow.pop %v1755
  %v1757 = vadd.f32 %v1756, 1.0
  %v1758 = vrcp.pop %v1757
  %v1759 = vmul.f32 1.0, %v1758
  %v1760 = vmul.f32 %v1752, %v1644
  %v1761 = vmul.f32 %v1746, %v1753
  %v1762 = vadd.f32 %v1760, %v1761
  %v1763 = vtanh.pop %v1762
  %v1764 = vmul.f32 %v1759, %v1763
  %s1765 = smul.u32 9, 4
  %s1766 = smul.addr %s1765, 8
  %s1767 = scalar_lea.vmem [#allocation2], %s1766
  %v1768 = vld [vmem:[%s1767] sm:$0xff]
  %v1769 = vld [vmem:[%s1767 + $0x8] sm:$0xff]
  %v1770 = vld [vmem:[%s1767 + $0x10] sm:$0xff]
  %v1771 = vld [vmem:[%s1767 + $0x18] sm:$0xff]
  %v1772 = vpack.c.bf16 %v1764, %v1764
  %1773 = vmatprep.subr.bf16.mxu0 %v648
  %1774 = vmatpush1.bf16.msra.mxu0 %v647
  %1775 = vmatprep.subr.bf16.mxu0 %v652
  %1776 = vmatpush1.bf16.msra.mxu0 %v651
  %1777 = vmatprep.subr.bf16.mxu0 %v656
  %1778 = vmatpush1.bf16.msra.mxu0 %v655
  %1779 = vmatprep.subr.bf16.mxu0 %v660
  %1780 = vmatpush1.bf16.msra.mxu0 %v659
  %1781 = vmatprep.subr.bf16.mxu0 %v664
  %1782 = vmatpush1.bf16.msra.mxu0 %v663
  %1783 = vmatprep.subr.bf16.mxu0 %v668
  %1784 = vmatpush1.bf16.msra.mxu0 %v667
  %1785 = vmatprep.subr.bf16.mxu0 %v672
  %1786 = vmatpush1.bf16.msra.mxu0 %v671
  %1787 = vmatprep.subr.bf16.mxu0 %v676
  %1788 = vmatpush1.bf16.msra.mxu0 %v675
  %1789 = vmatprep.subr.bf16.mxu0 0
  %1790 = vmatpush1.bf16.msra.mxu0 0
  %1791 = vmatprep.subr.bf16.mxu0 0
  %1792 = vmatpush1.bf16.msra.mxu0 0
  %1793 = vmatprep.subr.bf16.mxu0 0
  %1794 = vmatpush1.bf16.msra.mxu0 0
  %1795 = vmatprep.subr.bf16.mxu0 0
  %1796 = vmatpush1.bf16.msra.mxu0 0
  %1797 = vmatprep.subr.bf16.mxu0 0
  %1798 = vmatpush1.bf16.msra.mxu0 0
  %1799 = vmatprep.subr.bf16.mxu0 0
  %1800 = vmatpush1.bf16.msra.mxu0 0
  %1801 = vmatprep.subr.bf16.mxu0 0
  %1802 = vmatpush1.bf16.msra.mxu0 0
  %1803 = vmatprep.subr.bf16.mxu0 0
  %1804 = vmatpush1.bf16.msra.mxu0 0
  %1805 = vmatprep.mubr.bf16.mxu0 0
  %1806 = vmatmul.mubr.bf16.gmra.mrb[0].mxu0 %v1772
  %v1807 = vpop.f32.mrb[0].mxu0
  %v1808 = vadd.f32 0.0, %v1807
  %v1809 = vpop.f32.mrb[0].mxu0
  %v1810 = vadd.f32 0.0, %v1809
  %v1811 = vpop.f32.mrb[0].mxu0
  %v1812 = vpop.f32.mrb[0].mxu0
  %1813 = vdwg.mxu0
  %1814 = vmatprep.subr.bf16.mxu0 %v650
  %1815 = vmatpush1.bf16.msra.mxu0 %v649
  %1816 = vmatprep.subr.bf16.mxu0 %v654
  %1817 = vmatpush1.bf16.msra.mxu0 %v653
  %1818 = vmatprep.subr.bf16.mxu0 %v658
  %1819 = vmatpush1.bf16.msra.mxu0 %v657
  %1820 = vmatprep.subr.bf16.mxu0 %v662
  %1821 = vmatpush1.bf16.msra.mxu0 %v661
  %1822 = vmatprep.subr.bf16.mxu0 %v666
  %1823 = vmatpush1.bf16.msra.mxu0 %v665
  %1824 = vmatprep.subr.bf16.mxu0 %v670
  %1825 = vmatpush1.bf16.msra.mxu0 %v669
  %1826 = vmatprep.subr.bf16.mxu0 %v674
  %1827 = vmatpush1.bf16.msra.mxu0 %v673
  %1828 = vmatprep.subr.bf16.mxu0 %v678
  %1829 = vmatpush1.bf16.msra.mxu0 %v677
  %1830 = vmatprep.subr.bf16.mxu0 0
  %1831 = vmatpush1.bf16.msra.mxu0 0
  %1832 = vmatprep.subr.bf16.mxu0 0
  %1833 = vmatpush1.bf16.msra.mxu0 0
  %1834 = vmatprep.subr.bf16.mxu0 0
  %1835 = vmatpush1.bf16.msra.mxu0 0
  %1836 = vmatprep.subr.bf16.mxu0 0
  %1837 = vmatpush1.bf16.msra.mxu0 0
  %1838 = vmatprep.subr.bf16.mxu0 0
  %1839 = vmatpush1.bf16.msra.mxu0 0
  %1840 = vmatprep.subr.bf16.mxu0 0
  %1841 = vmatpush1.bf16.msra.mxu0 0
  %1842 = vmatprep.subr.bf16.mxu0 0
  %1843 = vmatpush1.bf16.msra.mxu0 0
  %1844 = vmatprep.subr.bf16.mxu0 0
  %1845 = vmatpush1.bf16.msra.mxu0 0
  %1846 = vmatprep.mubr.bf16.mxu0 0
  %1847 = vmatmul.mubr.bf16.gmra.mrb[0].mxu0 %v1772
  %v1848 = vpop.f32.mrb[0].mxu0
  %v1849 = vadd.f32 0.0, %v1848
  %v1850 = vpop.f32.mrb[0].mxu0
  %v1851 = vadd.f32 0.0, %v1850
  %v1852 = vpop.f32.mrb[0].mxu0
  %v1853 = vpop.f32.mrb[0].mxu0
  %1854 = vdwg.mxu0
  %v1855 = vadd.f32 %v1768, %v1808
  %v1856 = vadd.f32 %v1769, %v1810
  %v1857 = vadd.f32 %v1770, %v1849
  %v1858 = vadd.f32 %v1771, %v1851
  %v1859 = vxor.u32 %v1855, 2147483648
  %v1860 = vmul.f32 %v1859, 1.442695
  %v1861 = vpow.pop %v1860
  %v1862 = vadd.f32 %v1861, 1.0
  %v1863 = vrcp.pop %v1862
  %v1864 = vmul.f32 1.0, %v1863
  %v1865 = vxor.u32 %v1856, 2147483648
  %v1866 = vmul.f32 %v1865, 1.442695
  %v1867 = vpow.pop %v1866
  %v1868 = vadd.f32 %v1867, 1.0
  %v1869 = vrcp.pop %v1868
  %v1870 = vmul.f32 1.0, %v1869
  %v1871 = vtanh.pop %v1857
  %v1872 = vxor.u32 %v1858, 2147483648
  %v1873 = vmul.f32 %v1872, 1.442695
  %v1874 = vpow.pop %v1873
  %v1875 = vadd.f32 %v1874, 1.0
  %v1876 = vrcp.pop %v1875
  %v1877 = vmul.f32 1.0, %v1876
  %v1878 = vmul.f32 %v1870, %v1762
  %v1879 = vmul.f32 %v1864, %v1871
  %v1880 = vadd.f32 %v1878, %v1879
  %v1881 = vtanh.pop %v1880
  %v1882 = vmul.f32 %v1877, %v1881
  %v1883 = vpack.c.bf16 %v1882, %v1882
  %v1884 = vld [vmem:[%s5] sm:$0xf]
  %v1885 = vld [vmem:[%s5 + $0x4] sm:$0xf]
  %v1886 = vld [vmem:[%s5 + $0x8] sm:$0xf]
  %v1887 = vld [vmem:[%s5 + $0xc] sm:$0xf]
  %v1888 = vld [vmem:[%s5 + $0x10] sm:$0xf]
  %v1889 = vld [vmem:[%s5 + $0x14] sm:$0xf]
  %v1890 = vld [vmem:[%s5 + $0x18] sm:$0xf]
  %v1891 = vld [vmem:[%s5 + $0x1c] sm:$0xf]
  %v1892 = vld [vmem:[%s5 + $0x20] sm:$0xf]
  %v1893 = vld [vmem:[%s5 + $0x24] sm:$0xf]
  %v1894 = vld [vmem:[%s5 + $0x28] sm:$0xf]
  %v1895 = vld [vmem:[%s5 + $0x2c] sm:$0xf]
  %v1896 = vld [vmem:[%s5 + $0x30] sm:$0xf]
  %v1897 = vld [vmem:[%s5 + $0x34] sm:$0xf]
  %v1898 = vld [vmem:[%s5 + $0x38] sm:$0xf]
  %v1899 = vld [vmem:[%s5 + $0x3c] sm:$0xf]
  %v1900 = vld [vmem:[%s6] sm:$0x1]
  %v1902 = vlaneseq
  %v1903 = vshrl.u32 %v1902, 7
  %v1904 = vsub.s32 0, %v1903
  %v1905 = vrot.slane %v1900, %v1904
  %v1923 = vunpack.c.l.b16 %v1884
  %v1924 = vunpack.c.l.b16 %v1885
  %v1925 = vunpack.c.l.b16 %v1886
  %v1926 = vunpack.c.l.b16 %v1887
  %v1927 = vunpack.c.l.b16 %v1888
  %v1928 = vunpack.c.l.b16 %v1889
  %v1929 = vunpack.c.l.b16 %v1890
  %v1930 = vunpack.c.l.b16 %v1891
  %v1931 = vunpack.c.l.b16 %v1892
  %v1932 = vunpack.c.l.b16 %v1893
  %v1933 = vunpack.c.l.b16 %v1894
  %v1934 = vunpack.c.l.b16 %v1895
  %v1935 = vunpack.c.l.b16 %v1896
  %v1936 = vunpack.c.l.b16 %v1897
  %v1937 = vunpack.c.l.b16 %v1898
  %v1938 = vunpack.c.l.b16 %v1899
  %v1939 = vpack.c.b16 %v1924, %v1923
  %v1940 = vpack.c.b16 %v1926, %v1925
  %v1941 = vpack.c.b16 %v1928, %v1927
  %v1942 = vpack.c.b16 %v1930, %v1929
  %v1943 = vpack.c.b16 %v1932, %v1931
  %v1944 = vpack.c.b16 %v1934, %v1933
  %v1945 = vpack.c.b16 %v1936, %v1935
  %v1946 = vpack.c.b16 %v1938, %v1937
  %1955 = vmatprep.subr.bf16.mxu0 0
  %1956 = vmatpush1.bf16.msra.mxu0 %v1939
  %1957 = vmatprep.subr.bf16.mxu0 0
  %1958 = vmatpush1.bf16.msra.mxu0 %v1940
  %1959 = vmatprep.subr.bf16.mxu0 0
  %1960 = vmatpush1.bf16.msra.mxu0 %v1941
  %1961 = vmatprep.subr.bf16.mxu0 0
  %1962 = vmatpush1.bf16.msra.mxu0 %v1942
  %1963 = vmatprep.subr.bf16.mxu0 0
  %1964 = vmatpush1.bf16.msra.mxu0 %v1943
  %1965 = vmatprep.subr.bf16.mxu0 0
  %1966 = vmatpush1.bf16.msra.mxu0 %v1944
  %1967 = vmatprep.subr.bf16.mxu0 0
  %1968 = vmatpush1.bf16.msra.mxu0 %v1945
  %1969 = vmatprep.subr.bf16.mxu0 0
  %1970 = vmatpush1.bf16.msra.mxu0 %v1946
  %1971 = vmatprep.subr.bf16.mxu0 0
  %1972 = vmatpush1.bf16.msra.mxu0 0
  %1973 = vmatprep.subr.bf16.mxu0 0
  %1974 = vmatpush1.bf16.msra.mxu0 0
  %1975 = vmatprep.subr.bf16.mxu0 0
  %1976 = vmatpush1.bf16.msra.mxu0 0
  %1977 = vmatprep.subr.bf16.mxu0 0
  %1978 = vmatpush1.bf16.msra.mxu0 0
  %1979 = vmatprep.subr.bf16.mxu0 0
  %1980 = vmatpush1.bf16.msra.mxu0 0
  %1981 = vmatprep.subr.bf16.mxu0 0
  %1982 = vmatpush1.bf16.msra.mxu0 0
  %1983 = vmatprep.subr.bf16.mxu0 0
  %1984 = vmatpush1.bf16.msra.mxu0 0
  %1985 = vmatprep.subr.bf16.mxu0 0
  %1986 = vmatpush1.bf16.msra.mxu0 0
  %1987 = vmatprep.mubr.bf16.mxu0 0
  %1988 = vmatmul.mubr.bf16.gmra.mrb[0].mxu0 %v1883
  %v1989 = vpop.f32.mrb[0].mxu0
  %v1990 = vadd.f32 %v1905, %v1989
  %v1991 = vpop.f32.mrb[0].mxu0
  %v1992 = vpop.f32.mrb[0].mxu0
  %v1993 = vpop.f32.mrb[0].mxu0
  %1994 = vdwg.mxu0
  %1995 = vst [vmem:[%s7] sm:$0xff] %v1990
  // Predicated region
  $region30: #{encoder_forward.1} parent=0 // pred_check
    _
  $region31: #{encoder_forward.1} parent=0 // pred_check_branch
    %1997 = sbr.rel (0) target = $region33
  $region32: #{encoder_forward.1} parent=0 // pred_region
    _
  $region33: #{encoder_forward.1} parent=0 // pred_fallthru
    _
  // Predicated region
  $region34: #{encoder_forward.1} parent=0 // pred_check
    _
  $region35: #{encoder_forward.1} parent=0 // pred_check_branch
    %1999 = sbr.rel (0) target = $region37
  $region36: #{encoder_forward.1} parent=0 // pred_region
    _
  $region37: #{encoder_forward.1} parent=0 // pred_fallthru
    _

</llo_original>
